<compile_context>
chip_gen: v7x
topology: tpu7x:2x2x1
jax: 0.10.0
libtpu: 0.0.40
codegen_flags: <defaults>
</compile_context>

<pallas_src>
import functools
import math

import jax
import jax.numpy as jnp
from jax.experimental import pallas as pl
from jax.experimental.pallas import tpu as pltpu


# ------------------------------ fused MHA kernel ------------------------------

def _fused_mha_kernel(vl_ref, q_in_ref, k_in_ref, v_in_ref,
                      wq_ref, wk_ref, wv_ref, wo_ref, o_ref, *, num_heads):
    """Single grid step: all batch elements and all heads handled here.

    vl_ref : SMEM (B,) int32 valid lengths (scalar prefetch)
    q_in   : (B, Lq, q_dim)   k_in/v_in : (B, Lk, k_dim/v_dim)
    wq/wk/wv : (in_dim, D)    wo : (D, D)      o : (B, Lq, D)
    """
    B, Lq, _ = q_in_ref.shape
    Lk = k_in_ref.shape[1]
    D = wq_ref.shape[1]
    hd = D // num_heads
    scale = jnp.float32(1.0 / math.sqrt(hd))

    # Hoisted: column index grid shared by every batch element / head.
    col = jax.lax.broadcasted_iota(jnp.int32, (Lq, Lk), 1)
    dn = (((1,), (1,)), ((), ()))         # contract last dims of both, no batch dims

    for b in range(B):                    # static loop; B is tiny
        xq = q_in_ref[b]                  # (Lq, q_dim)
        xk = k_in_ref[b]                  # (Lk, k_dim)
        xv = v_in_ref[b]                  # (Lk, v_dim)

        # Fused input projections (MXU).  1/sqrt(hd) folded into q here.
        q = jnp.dot(xq, wq_ref[...], preferred_element_type=jnp.float32) * scale
        k = jnp.dot(xk, wk_ref[...], preferred_element_type=jnp.float32)
        v = jnp.dot(xv, wv_ref[...], preferred_element_type=jnp.float32)

        # sequence_mask semantics: positions >= valid_len get -1e6, then a plain
        # softmax.  Same mask for every head of this batch element
        # (== torch.repeat_interleave(valid_lens, num_heads)).
        keep = col < vl_ref[b]

        out_acc = jnp.zeros((Lq, D), jnp.float32)
        for h in range(num_heads):        # static loop; static column slices
            qs = q[:, h * hd:(h + 1) * hd]            # (Lq, hd)
            ks = k[:, h * hd:(h + 1) * hd]            # (Lk, hd)
            vs = v[:, h * hd:(h + 1) * hd]            # (Lk, hd)

            scores = jax.lax.dot_general(
                qs, ks, dn, preferred_element_type=jnp.float32)   # (Lq, Lk)
            scores = jnp.where(keep, scores, jnp.float32(-1000000.0))

            m = jnp.max(scores, axis=-1, keepdims=True)
            e = jnp.exp(scores - m)                                # (Lq, Lk)
            denom = jnp.sum(e, axis=-1, keepdims=True)             # (Lq, 1)

            pv = jnp.dot(e, vs, preferred_element_type=jnp.float32)  # (Lq, hd)
            head_out = pv / denom                                  # exact divide

            # Fold wo into the head loop: accumulate into the full-width output.
            out_acc = out_acc + jnp.dot(
                head_out, wo_ref[h * hd:(h + 1) * hd, :],
                preferred_element_type=jnp.float32)                # (Lq, D)

        o_ref[b] = out_acc.astype(o_ref.dtype)


def multi_head_attention(params, queries, keys, values, valid_lens, num_heads):
    """Mirrors MultiHeadAttention.forward (dropout is unused in the reference forward)."""
    B, Lq, q_dim = queries.shape
    _, Lk, k_dim = keys.shape
    _, _, v_dim = values.shape
    D = params["wq"].shape[1]

    vl = jnp.asarray(valid_lens, jnp.int32)
    kernel = functools.partial(_fused_mha_kernel, num_heads=num_heads)

    grid_spec = pltpu.PrefetchScalarGridSpec(
        num_scalar_prefetch=1,
        grid=(1,),                                   # single step: overhead-bound regime
        in_specs=[
            # activations: full arrays in one block (block shape == array shape)
            pl.BlockSpec((B, Lq, q_dim), lambda i, vl: (0, 0, 0)),
            pl.BlockSpec((B, Lk, k_dim), lambda i, vl: (0, 0, 0)),
            pl.BlockSpec((B, Lk, v_dim), lambda i, vl: (0, 0, 0)),
            # weights: full arrays, constant index
            pl.BlockSpec((q_dim, D), lambda i, vl: (0, 0)),
            pl.BlockSpec((k_dim, D), lambda i, vl: (0, 0)),
            pl.BlockSpec((v_dim, D), lambda i, vl: (0, 0)),
            pl.BlockSpec((D, D), lambda i, vl: (0, 0)),
        ],
        out_specs=pl.BlockSpec((B, Lq, D), lambda i, vl: (0, 0, 0)),
    )

    return pl.pallas_call(
        kernel,
        out_shape=jax.ShapeDtypeStruct((B, Lq, D), jnp.float32),
        grid_spec=grid_spec,
        compiler_params=pltpu.CompilerParams(
            dimension_semantics=("arbitrary",)),     # single step; no megacore split
    )(vl, queries, keys, values,
      params["wq"], params["wk"], params["wv"], params["wo"])


# ------------------------------ pure-JAX reference -----------------------------

def _transpose_input(x, num_heads):
    B, L, Dd = x.shape
    x = x.reshape(B, L, num_heads, Dd // num_heads)
    x = jnp.transpose(x, (0, 2, 1, 3))
    return x.reshape(B * num_heads, L, Dd // num_heads)


def _transpose_output(x, num_heads):
    BH, L, hd = x.shape
    B = BH // num_heads
    x = x.reshape(B, num_heads, L, hd)
    x = jnp.transpose(x, (0, 2, 1, 3))
    return x.reshape(B, L, num_heads * hd)


def reference_mha(params, queries, keys, values, valid_lens, num_heads):
    D = params["wq"].shape[1]
    q = _transpose_input(queries @ params["wq"], num_heads)
    k = _transpose_input(keys @ params["wk"], num_heads)
    v = _transpose_input(values @ params["wv"], num_heads)
    vl = jnp.repeat(valid_lens.astype(jnp.int32), num_heads, axis=0)   # (B*H,)
    hd = D // num_heads
    scores = jnp.einsum("bqd,bkd->bqk", q, k) / math.sqrt(hd)
    col = jnp.arange(scores.shape[-1])[None, None, :]
    scores = jnp.where(col < vl[:, None, None], scores, -1000000.0)
    probs = jax.nn.softmax(scores, axis=-1)
    out = jnp.einsum("bqk,bkd->bqd", probs, v)
    out = _transpose_output(out, num_heads)
    return out @ params["wo"]


# ----------------------------------- main --------------------------------------

if __name__ == "__main__":
    B, Lq, Lk = 2, 8, 8
    query_dim = key_dim = value_dim = 16
    dimensionality = 32
    num_heads = 4  # head_dim = 8

    key = jax.random.PRNGKey(0)
    k0, k1, k2, k3, k4, k5, k6 = jax.random.split(key, 7)

    # Weights stored as (in_dim, out_dim) so y = x @ W  (== nn.Linear(..., bias=False)).
    params = {
        "wq": jax.random.normal(k0, (query_dim, dimensionality), jnp.float32) * 0.1,
        "wk": jax.random.normal(k1, (key_dim, dimensionality), jnp.float32) * 0.1,
        "wv": jax.random.normal(k2, (value_dim, dimensionality), jnp.float32) * 0.1,
        "wo": jax.random.normal(k3, (dimensionality, dimensionality), jnp.float32) * 0.1,
    }

    queries = jax.random.normal(k4, (B, Lq, query_dim), jnp.float32)
    keys = jax.random.normal(k5, (B, Lk, key_dim), jnp.float32)
    values = jax.random.normal(k6, (B, Lk, value_dim), jnp.float32)
    valid_lens = jnp.array([5, 8], dtype=jnp.int32)   # per-batch valid lengths

    out = multi_head_attention(params, queries, keys, values, valid_lens, num_heads)
    out = jax.block_until_ready(out)

    ref = reference_mha(params, queries, keys, values, valid_lens, num_heads)
    assert out.shape == (B, Lq, dimensionality)
    # Exact softmax divide now used (no approximate reciprocal), so tolerance is tighter.
    assert jnp.allclose(out, ref, atol=2e-3, rtol=2e-3), "mismatch vs pure-JAX reference"

    print("KERNEL_OK")
</pallas_src>

<mosaic_0001>
module attributes {stable_mosaic.version = 11 : i64} {
  func.func @_fused_mha_kernel(%arg0: i32, %arg1: memref<2xi32, #tpu.memory_space<smem>>, %arg2: memref<2x8x16xf32, #tpu.memory_space<vmem>>, %arg3: memref<2x8x16xf32, #tpu.memory_space<vmem>>, %arg4: memref<2x8x16xf32, #tpu.memory_space<vmem>>, %arg5: memref<16x32xf32, #tpu.memory_space<vmem>>, %arg6: memref<16x32xf32, #tpu.memory_space<vmem>>, %arg7: memref<16x32xf32, #tpu.memory_space<vmem>>, %arg8: memref<32x32xf32, #tpu.memory_space<vmem>>, %arg9: memref<2x8x32xf32, #tpu.memory_space<vmem>>) attributes {dimension_semantics = [#tpu.dimension_semantics<arbitrary>], iteration_bounds = array<i64: 1>, scalar_prefetch = 1 : i64, scratch_operands = 0 : i64, tpu.core_type = #tpu.core_type<tc>, window_params = [{pipeline_mode = #tpu.pipeline_mode<synchronous>, transform_indices = @transform_0, window_bounds = array<i64: 2, 8, 16>}, {pipeline_mode = #tpu.pipeline_mode<synchronous>, transform_indices = @transform_1, window_bounds = array<i64: 2, 8, 16>}, {pipeline_mode = #tpu.pipeline_mode<synchronous>, transform_indices = @transform_2, window_bounds = array<i64: 2, 8, 16>}, {pipeline_mode = #tpu.pipeline_mode<synchronous>, transform_indices = @transform_3, window_bounds = array<i64: 16, 32>}, {pipeline_mode = #tpu.pipeline_mode<synchronous>, transform_indices = @transform_4, window_bounds = array<i64: 16, 32>}, {pipeline_mode = #tpu.pipeline_mode<synchronous>, transform_indices = @transform_5, window_bounds = array<i64: 16, 32>}, {pipeline_mode = #tpu.pipeline_mode<synchronous>, transform_indices = @transform_6, window_bounds = array<i64: 32, 32>}, {pipeline_mode = #tpu.pipeline_mode<synchronous>, transform_indices = @transform_7, window_bounds = array<i64: 2, 8, 32>}]} {
    %0 = tpu.iota {dimensions = array<i32: 1>} : vector<8x8xi32>
    %c0 = arith.constant 0 : index
    %c0_0 = arith.constant 0 : index
    %c0_1 = arith.constant 0 : index
    %1 = vector.load %arg2[%c0, %c0_0, %c0_1] : memref<2x8x16xf32, #tpu.memory_space<vmem>>, vector<1x8x16xf32>
    %2 = vector.shape_cast %1 : vector<1x8x16xf32> to vector<8x16xf32>
    %c0_2 = arith.constant 0 : index
    %c0_3 = arith.constant 0 : index
    %c0_4 = arith.constant 0 : index
    %3 = vector.load %arg3[%c0_2, %c0_3, %c0_4] : memref<2x8x16xf32, #tpu.memory_space<vmem>>, vector<1x8x16xf32>
    %4 = vector.shape_cast %3 : vector<1x8x16xf32> to vector<8x16xf32>
    %c0_5 = arith.constant 0 : index
    %c0_6 = arith.constant 0 : index
    %c0_7 = arith.constant 0 : index
    %5 = vector.load %arg4[%c0_5, %c0_6, %c0_7] : memref<2x8x16xf32, #tpu.memory_space<vmem>>, vector<1x8x16xf32>
    %6 = vector.shape_cast %5 : vector<1x8x16xf32> to vector<8x16xf32>
    %c0_8 = arith.constant 0 : index
    %c0_9 = arith.constant 0 : index
    %7 = vector.load %arg5[%c0_8, %c0_9] : memref<16x32xf32, #tpu.memory_space<vmem>>, vector<16x32xf32>
    %cst = arith.constant dense<0.000000e+00> : vector<8x32xf32>
    %8 = tpu.matmul %2, %7, %cst {dimension_numbers = #tpu.dot_dimension_numbers<[1], [0], [0], [1], [0, 0, 1, 1], [], []>} : vector<8x16xf32>, vector<16x32xf32>, vector<8x32xf32> -> vector<8x32xf32>
    %cst_10 = arith.constant 0.353553385 : f32
    %9 = vector.broadcast %cst_10 : f32 to vector<8x32xf32>
    %10 = arith.mulf %8, %9 : vector<8x32xf32>
    %c0_11 = arith.constant 0 : index
    %c0_12 = arith.constant 0 : index
    %11 = vector.load %arg6[%c0_11, %c0_12] : memref<16x32xf32, #tpu.memory_space<vmem>>, vector<16x32xf32>
    %cst_13 = arith.constant dense<0.000000e+00> : vector<8x32xf32>
    %12 = tpu.matmul %4, %11, %cst_13 {dimension_numbers = #tpu.dot_dimension_numbers<[1], [0], [0], [1], [0, 0, 1, 1], [], []>} : vector<8x16xf32>, vector<16x32xf32>, vector<8x32xf32> -> vector<8x32xf32>
    %c0_14 = arith.constant 0 : index
    %c0_15 = arith.constant 0 : index
    %13 = vector.load %arg7[%c0_14, %c0_15] : memref<16x32xf32, #tpu.memory_space<vmem>>, vector<16x32xf32>
    %cst_16 = arith.constant dense<0.000000e+00> : vector<8x32xf32>
    %14 = tpu.matmul %6, %13, %cst_16 {dimension_numbers = #tpu.dot_dimension_numbers<[1], [0], [0], [1], [0, 0, 1, 1], [], []>} : vector<8x16xf32>, vector<16x32xf32>, vector<8x32xf32> -> vector<8x32xf32>
    %c0_17 = arith.constant 0 : index
    %15 = memref.load %arg1[%c0_17] : memref<2xi32, #tpu.memory_space<smem>>
    %16 = vector.broadcast %15 : i32 to vector<8x8xi32>
    %17 = arith.cmpi slt, %0, %16 : vector<8x8xi32>
    %cst_18 = arith.constant 0.000000e+00 : f32
    %18 = vector.broadcast %cst_18 : f32 to vector<8x32xf32>
    %19 = vector.extract_strided_slice %10 {offsets = [0, 0], sizes = [8, 8], strides = [1, 1]} : vector<8x32xf32> to vector<8x8xf32>
    %20 = vector.extract_strided_slice %12 {offsets = [0, 0], sizes = [8, 8], strides = [1, 1]} : vector<8x32xf32> to vector<8x8xf32>
    %21 = vector.extract_strided_slice %14 {offsets = [0, 0], sizes = [8, 8], strides = [1, 1]} : vector<8x32xf32> to vector<8x8xf32>
    %cst_19 = arith.constant dense<0.000000e+00> : vector<8x8xf32>
    %22 = tpu.matmul %19, %20, %cst_19 {dimension_numbers = #tpu.dot_dimension_numbers<[1], [1], [0], [0], [0, 0, 1, 0], [], []>} : vector<8x8xf32>, vector<8x8xf32>, vector<8x8xf32> -> vector<8x8xf32>
    %cst_20 = arith.constant -1.000000e+06 : f32
    %23 = vector.broadcast %cst_20 : f32 to vector<8x8xf32>
    %24 = arith.select %17, %22, %23 : vector<8x8xi1>, vector<8x8xf32>
    %cst_21 = arith.constant dense<0xFF800000> : vector<8xf32>
    %25 = vector.multi_reduction <maximumf>, %24, %cst_21 [1] : vector<8x8xf32> to vector<8xf32>
    %26 = vector.shape_cast %25 : vector<8xf32> to vector<8x1xf32>
    %27 = vector.broadcast %26 : vector<8x1xf32> to vector<8x8xf32>
    %28 = arith.subf %24, %27 : vector<8x8xf32>
    %29 = math.exp %28 : vector<8x8xf32>
    %cst_22 = arith.constant dense<0.000000e+00> : vector<8xf32>
    %30 = vector.multi_reduction <add>, %29, %cst_22 [1] : vector<8x8xf32> to vector<8xf32>
    %31 = vector.shape_cast %30 : vector<8xf32> to vector<8x1xf32>
    %cst_23 = arith.constant dense<0.000000e+00> : vector<8x8xf32>
    %32 = tpu.matmul %29, %21, %cst_23 {dimension_numbers = #tpu.dot_dimension_numbers<[1], [0], [0], [1], [0, 0, 1, 1], [], []>} : vector<8x8xf32>, vector<8x8xf32>, vector<8x8xf32> -> vector<8x8xf32>
    %33 = vector.broadcast %31 : vector<8x1xf32> to vector<8x8xf32>
    %34 = arith.divf %32, %33 : vector<8x8xf32>
    %c0_24 = arith.constant 0 : index
    %c0_25 = arith.constant 0 : index
    %35 = vector.load %arg8[%c0_24, %c0_25] : memref<32x32xf32, #tpu.memory_space<vmem>>, vector<8x32xf32>
    %cst_26 = arith.constant dense<0.000000e+00> : vector<8x32xf32>
    %36 = tpu.matmul %34, %35, %cst_26 {dimension_numbers = #tpu.dot_dimension_numbers<[1], [0], [0], [1], [0, 0, 1, 1], [], []>} : vector<8x8xf32>, vector<8x32xf32>, vector<8x32xf32> -> vector<8x32xf32>
    %37 = arith.addf %18, %36 : vector<8x32xf32>
    %38 = vector.extract_strided_slice %10 {offsets = [0, 8], sizes = [8, 8], strides = [1, 1]} : vector<8x32xf32> to vector<8x8xf32>
    %39 = vector.extract_strided_slice %12 {offsets = [0, 8], sizes = [8, 8], strides = [1, 1]} : vector<8x32xf32> to vector<8x8xf32>
    %40 = vector.extract_strided_slice %14 {offsets = [0, 8], sizes = [8, 8], strides = [1, 1]} : vector<8x32xf32> to vector<8x8xf32>
    %cst_27 = arith.constant dense<0.000000e+00> : vector<8x8xf32>
    %41 = tpu.matmul %38, %39, %cst_27 {dimension_numbers = #tpu.dot_dimension_numbers<[1], [1], [0], [0], [0, 0, 1, 0], [], []>} : vector<8x8xf32>, vector<8x8xf32>, vector<8x8xf32> -> vector<8x8xf32>
    %cst_28 = arith.constant -1.000000e+06 : f32
    %42 = vector.broadcast %cst_28 : f32 to vector<8x8xf32>
    %43 = arith.select %17, %41, %42 : vector<8x8xi1>, vector<8x8xf32>
    %cst_29 = arith.constant dense<0xFF800000> : vector<8xf32>
    %44 = vector.multi_reduction <maximumf>, %43, %cst_29 [1] : vector<8x8xf32> to vector<8xf32>
    %45 = vector.shape_cast %44 : vector<8xf32> to vector<8x1xf32>
    %46 = vector.broadcast %45 : vector<8x1xf32> to vector<8x8xf32>
    %47 = arith.subf %43, %46 : vector<8x8xf32>
    %48 = math.exp %47 : vector<8x8xf32>
    %cst_30 = arith.constant dense<0.000000e+00> : vector<8xf32>
    %49 = vector.multi_reduction <add>, %48, %cst_30 [1] : vector<8x8xf32> to vector<8xf32>
    %50 = vector.shape_cast %49 : vector<8xf32> to vector<8x1xf32>
    %cst_31 = arith.constant dense<0.000000e+00> : vector<8x8xf32>
    %51 = tpu.matmul %48, %40, %cst_31 {dimension_numbers = #tpu.dot_dimension_numbers<[1], [0], [0], [1], [0, 0, 1, 1], [], []>} : vector<8x8xf32>, vector<8x8xf32>, vector<8x8xf32> -> vector<8x8xf32>
    %52 = vector.broadcast %50 : vector<8x1xf32> to vector<8x8xf32>
    %53 = arith.divf %51, %52 : vector<8x8xf32>
    %c8 = arith.constant 8 : index
    %c0_32 = arith.constant 0 : index
    %54 = vector.load %arg8[%c8, %c0_32] : memref<32x32xf32, #tpu.memory_space<vmem>>, vector<8x32xf32>
    %cst_33 = arith.constant dense<0.000000e+00> : vector<8x32xf32>
    %55 = tpu.matmul %53, %54, %cst_33 {dimension_numbers = #tpu.dot_dimension_numbers<[1], [0], [0], [1], [0, 0, 1, 1], [], []>} : vector<8x8xf32>, vector<8x32xf32>, vector<8x32xf32> -> vector<8x32xf32>
    %56 = arith.addf %37, %55 : vector<8x32xf32>
    %57 = vector.extract_strided_slice %10 {offsets = [0, 16], sizes = [8, 8], strides = [1, 1]} : vector<8x32xf32> to vector<8x8xf32>
    %58 = vector.extract_strided_slice %12 {offsets = [0, 16], sizes = [8, 8], strides = [1, 1]} : vector<8x32xf32> to vector<8x8xf32>
    %59 = vector.extract_strided_slice %14 {offsets = [0, 16], sizes = [8, 8], strides = [1, 1]} : vector<8x32xf32> to vector<8x8xf32>
    %cst_34 = arith.constant dense<0.000000e+00> : vector<8x8xf32>
    %60 = tpu.matmul %57, %58, %cst_34 {dimension_numbers = #tpu.dot_dimension_numbers<[1], [1], [0], [0], [0, 0, 1, 0], [], []>} : vector<8x8xf32>, vector<8x8xf32>, vector<8x8xf32> -> vector<8x8xf32>
    %cst_35 = arith.constant -1.000000e+06 : f32
    %61 = vector.broadcast %cst_35 : f32 to vector<8x8xf32>
    %62 = arith.select %17, %60, %61 : vector<8x8xi1>, vector<8x8xf32>
    %cst_36 = arith.constant dense<0xFF800000> : vector<8xf32>
    %63 = vector.multi_reduction <maximumf>, %62, %cst_36 [1] : vector<8x8xf32> to vector<8xf32>
    %64 = vector.shape_cast %63 : vector<8xf32> to vector<8x1xf32>
    %65 = vector.broadcast %64 : vector<8x1xf32> to vector<8x8xf32>
    %66 = arith.subf %62, %65 : vector<8x8xf32>
    %67 = math.exp %66 : vector<8x8xf32>
    %cst_37 = arith.constant dense<0.000000e+00> : vector<8xf32>
    %68 = vector.multi_reduction <add>, %67, %cst_37 [1] : vector<8x8xf32> to vector<8xf32>
    %69 = vector.shape_cast %68 : vector<8xf32> to vector<8x1xf32>
    %cst_38 = arith.constant dense<0.000000e+00> : vector<8x8xf32>
    %70 = tpu.matmul %67, %59, %cst_38 {dimension_numbers = #tpu.dot_dimension_numbers<[1], [0], [0], [1], [0, 0, 1, 1], [], []>} : vector<8x8xf32>, vector<8x8xf32>, vector<8x8xf32> -> vector<8x8xf32>
    %71 = vector.broadcast %69 : vector<8x1xf32> to vector<8x8xf32>
    %72 = arith.divf %70, %71 : vector<8x8xf32>
    %c16 = arith.constant 16 : index
    %c0_39 = arith.constant 0 : index
    %73 = vector.load %arg8[%c16, %c0_39] : memref<32x32xf32, #tpu.memory_space<vmem>>, vector<8x32xf32>
    %cst_40 = arith.constant dense<0.000000e+00> : vector<8x32xf32>
    %74 = tpu.matmul %72, %73, %cst_40 {dimension_numbers = #tpu.dot_dimension_numbers<[1], [0], [0], [1], [0, 0, 1, 1], [], []>} : vector<8x8xf32>, vector<8x32xf32>, vector<8x32xf32> -> vector<8x32xf32>
    %75 = arith.addf %56, %74 : vector<8x32xf32>
    %76 = vector.extract_strided_slice %10 {offsets = [0, 24], sizes = [8, 8], strides = [1, 1]} : vector<8x32xf32> to vector<8x8xf32>
    %77 = vector.extract_strided_slice %12 {offsets = [0, 24], sizes = [8, 8], strides = [1, 1]} : vector<8x32xf32> to vector<8x8xf32>
    %78 = vector.extract_strided_slice %14 {offsets = [0, 24], sizes = [8, 8], strides = [1, 1]} : vector<8x32xf32> to vector<8x8xf32>
    %cst_41 = arith.constant dense<0.000000e+00> : vector<8x8xf32>
    %79 = tpu.matmul %76, %77, %cst_41 {dimension_numbers = #tpu.dot_dimension_numbers<[1], [1], [0], [0], [0, 0, 1, 0], [], []>} : vector<8x8xf32>, vector<8x8xf32>, vector<8x8xf32> -> vector<8x8xf32>
    %cst_42 = arith.constant -1.000000e+06 : f32
    %80 = vector.broadcast %cst_42 : f32 to vector<8x8xf32>
    %81 = arith.select %17, %79, %80 : vector<8x8xi1>, vector<8x8xf32>
    %cst_43 = arith.constant dense<0xFF800000> : vector<8xf32>
    %82 = vector.multi_reduction <maximumf>, %81, %cst_43 [1] : vector<8x8xf32> to vector<8xf32>
    %83 = vector.shape_cast %82 : vector<8xf32> to vector<8x1xf32>
    %84 = vector.broadcast %83 : vector<8x1xf32> to vector<8x8xf32>
    %85 = arith.subf %81, %84 : vector<8x8xf32>
    %86 = math.exp %85 : vector<8x8xf32>
    %cst_44 = arith.constant dense<0.000000e+00> : vector<8xf32>
    %87 = vector.multi_reduction <add>, %86, %cst_44 [1] : vector<8x8xf32> to vector<8xf32>
    %88 = vector.shape_cast %87 : vector<8xf32> to vector<8x1xf32>
    %cst_45 = arith.constant dense<0.000000e+00> : vector<8x8xf32>
    %89 = tpu.matmul %86, %78, %cst_45 {dimension_numbers = #tpu.dot_dimension_numbers<[1], [0], [0], [1], [0, 0, 1, 1], [], []>} : vector<8x8xf32>, vector<8x8xf32>, vector<8x8xf32> -> vector<8x8xf32>
    %90 = vector.broadcast %88 : vector<8x1xf32> to vector<8x8xf32>
    %91 = arith.divf %89, %90 : vector<8x8xf32>
    %c24 = arith.constant 24 : index
    %c0_46 = arith.constant 0 : index
    %92 = vector.load %arg8[%c24, %c0_46] : memref<32x32xf32, #tpu.memory_space<vmem>>, vector<8x32xf32>
    %cst_47 = arith.constant dense<0.000000e+00> : vector<8x32xf32>
    %93 = tpu.matmul %91, %92, %cst_47 {dimension_numbers = #tpu.dot_dimension_numbers<[1], [0], [0], [1], [0, 0, 1, 1], [], []>} : vector<8x8xf32>, vector<8x32xf32>, vector<8x32xf32> -> vector<8x32xf32>
    %94 = arith.addf %75, %93 : vector<8x32xf32>
    %c0_48 = arith.constant 0 : index
    %c0_49 = arith.constant 0 : index
    %c0_50 = arith.constant 0 : index
    %95 = vector.load %arg9[%c0_48, %c0_49, %c0_50] : memref<2x8x32xf32, #tpu.memory_space<vmem>>, vector<1x8x32xf32>
    %96 = vector.shape_cast %95 : vector<1x8x32xf32> to vector<8x32xf32>
    %97 = vector.shape_cast %94 : vector<8x32xf32> to vector<1x8x32xf32>
    tpu.vector_store %arg9[%c0_48, %c0_49, %c0_50], %97 {strides = array<i32>} : memref<2x8x32xf32, #tpu.memory_space<vmem>>, vector<1x8x32xf32>,
    %c1 = arith.constant 1 : index
    %c0_51 = arith.constant 0 : index
    %c0_52 = arith.constant 0 : index
    %98 = vector.load %arg2[%c1, %c0_51, %c0_52] : memref<2x8x16xf32, #tpu.memory_space<vmem>>, vector<1x8x16xf32>
    %99 = vector.shape_cast %98 : vector<1x8x16xf32> to vector<8x16xf32>
    %c1_53 = arith.constant 1 : index
    %c0_54 = arith.constant 0 : index
    %c0_55 = arith.constant 0 : index
    %100 = vector.load %arg3[%c1_53, %c0_54, %c0_55] : memref<2x8x16xf32, #tpu.memory_space<vmem>>, vector<1x8x16xf32>
    %101 = vector.shape_cast %100 : vector<1x8x16xf32> to vector<8x16xf32>
    %c1_56 = arith.constant 1 : index
    %c0_57 = arith.constant 0 : index
    %c0_58 = arith.constant 0 : index
    %102 = vector.load %arg4[%c1_56, %c0_57, %c0_58] : memref<2x8x16xf32, #tpu.memory_space<vmem>>, vector<1x8x16xf32>
    %103 = vector.shape_cast %102 : vector<1x8x16xf32> to vector<8x16xf32>
    %c0_59 = arith.constant 0 : index
    %c0_60 = arith.constant 0 : index
    %104 = vector.load %arg5[%c0_59, %c0_60] : memref<16x32xf32, #tpu.memory_space<vmem>>, vector<16x32xf32>
    %cst_61 = arith.constant dense<0.000000e+00> : vector<8x32xf32>
    %105 = tpu.matmul %99, %104, %cst_61 {dimension_numbers = #tpu.dot_dimension_numbers<[1], [0], [0], [1], [0, 0, 1, 1], [], []>} : vector<8x16xf32>, vector<16x32xf32>, vector<8x32xf32> -> vector<8x32xf32>
    %cst_62 = arith.constant 0.353553385 : f32
    %106 = vector.broadcast %cst_62 : f32 to vector<8x32xf32>
    %107 = arith.mulf %105, %106 : vector<8x32xf32>
    %c0_63 = arith.constant 0 : index
    %c0_64 = arith.constant 0 : index
    %108 = vector.load %arg6[%c0_63, %c0_64] : memref<16x32xf32, #tpu.memory_space<vmem>>, vector<16x32xf32>
    %cst_65 = arith.constant dense<0.000000e+00> : vector<8x32xf32>
    %109 = tpu.matmul %101, %108, %cst_65 {dimension_numbers = #tpu.dot_dimension_numbers<[1], [0], [0], [1], [0, 0, 1, 1], [], []>} : vector<8x16xf32>, vector<16x32xf32>, vector<8x32xf32> -> vector<8x32xf32>
    %c0_66 = arith.constant 0 : index
    %c0_67 = arith.constant 0 : index
    %110 = vector.load %arg7[%c0_66, %c0_67] : memref<16x32xf32, #tpu.memory_space<vmem>>, vector<16x32xf32>
    %cst_68 = arith.constant dense<0.000000e+00> : vector<8x32xf32>
    %111 = tpu.matmul %103, %110, %cst_68 {dimension_numbers = #tpu.dot_dimension_numbers<[1], [0], [0], [1], [0, 0, 1, 1], [], []>} : vector<8x16xf32>, vector<16x32xf32>, vector<8x32xf32> -> vector<8x32xf32>
    %c1_69 = arith.constant 1 : index
    %112 = memref.load %arg1[%c1_69] : memref<2xi32, #tpu.memory_space<smem>>
    %113 = vector.broadcast %112 : i32 to vector<8x8xi32>
    %114 = arith.cmpi slt, %0, %113 : vector<8x8xi32>
    %cst_70 = arith.constant 0.000000e+00 : f32
    %115 = vector.broadcast %cst_70 : f32 to vector<8x32xf32>
    %116 = vector.extract_strided_slice %107 {offsets = [0, 0], sizes = [8, 8], strides = [1, 1]} : vector<8x32xf32> to vector<8x8xf32>
    %117 = vector.extract_strided_slice %109 {offsets = [0, 0], sizes = [8, 8], strides = [1, 1]} : vector<8x32xf32> to vector<8x8xf32>
    %118 = vector.extract_strided_slice %111 {offsets = [0, 0], sizes = [8, 8], strides = [1, 1]} : vector<8x32xf32> to vector<8x8xf32>
    %cst_71 = arith.constant dense<0.000000e+00> : vector<8x8xf32>
    %119 = tpu.matmul %116, %117, %cst_71 {dimension_numbers = #tpu.dot_dimension_numbers<[1], [1], [0], [0], [0, 0, 1, 0], [], []>} : vector<8x8xf32>, vector<8x8xf32>, vector<8x8xf32> -> vector<8x8xf32>
    %cst_72 = arith.constant -1.000000e+06 : f32
    %120 = vector.broadcast %cst_72 : f32 to vector<8x8xf32>
    %121 = arith.select %114, %119, %120 : vector<8x8xi1>, vector<8x8xf32>
    %cst_73 = arith.constant dense<0xFF800000> : vector<8xf32>
    %122 = vector.multi_reduction <maximumf>, %121, %cst_73 [1] : vector<8x8xf32> to vector<8xf32>
    %123 = vector.shape_cast %122 : vector<8xf32> to vector<8x1xf32>
    %124 = vector.broadcast %123 : vector<8x1xf32> to vector<8x8xf32>
    %125 = arith.subf %121, %124 : vector<8x8xf32>
    %126 = math.exp %125 : vector<8x8xf32>
    %cst_74 = arith.constant dense<0.000000e+00> : vector<8xf32>
    %127 = vector.multi_reduction <add>, %126, %cst_74 [1] : vector<8x8xf32> to vector<8xf32>
    %128 = vector.shape_cast %127 : vector<8xf32> to vector<8x1xf32>
    %cst_75 = arith.constant dense<0.000000e+00> : vector<8x8xf32>
    %129 = tpu.matmul %126, %118, %cst_75 {dimension_numbers = #tpu.dot_dimension_numbers<[1], [0], [0], [1], [0, 0, 1, 1], [], []>} : vector<8x8xf32>, vector<8x8xf32>, vector<8x8xf32> -> vector<8x8xf32>
    %130 = vector.broadcast %128 : vector<8x1xf32> to vector<8x8xf32>
    %131 = arith.divf %129, %130 : vector<8x8xf32>
    %c0_76 = arith.constant 0 : index
    %c0_77 = arith.constant 0 : index
    %132 = vector.load %arg8[%c0_76, %c0_77] : memref<32x32xf32, #tpu.memory_space<vmem>>, vector<8x32xf32>
    %cst_78 = arith.constant dense<0.000000e+00> : vector<8x32xf32>
    %133 = tpu.matmul %131, %132, %cst_78 {dimension_numbers = #tpu.dot_dimension_numbers<[1], [0], [0], [1], [0, 0, 1, 1], [], []>} : vector<8x8xf32>, vector<8x32xf32>, vector<8x32xf32> -> vector<8x32xf32>
    %134 = arith.addf %115, %133 : vector<8x32xf32>
    %135 = vector.extract_strided_slice %107 {offsets = [0, 8], sizes = [8, 8], strides = [1, 1]} : vector<8x32xf32> to vector<8x8xf32>
    %136 = vector.extract_strided_slice %109 {offsets = [0, 8], sizes = [8, 8], strides = [1, 1]} : vector<8x32xf32> to vector<8x8xf32>
    %137 = vector.extract_strided_slice %111 {offsets = [0, 8], sizes = [8, 8], strides = [1, 1]} : vector<8x32xf32> to vector<8x8xf32>
    %cst_79 = arith.constant dense<0.000000e+00> : vector<8x8xf32>
    %138 = tpu.matmul %135, %136, %cst_79 {dimension_numbers = #tpu.dot_dimension_numbers<[1], [1], [0], [0], [0, 0, 1, 0], [], []>} : vector<8x8xf32>, vector<8x8xf32>, vector<8x8xf32> -> vector<8x8xf32>
    %cst_80 = arith.constant -1.000000e+06 : f32
    %139 = vector.broadcast %cst_80 : f32 to vector<8x8xf32>
    %140 = arith.select %114, %138, %139 : vector<8x8xi1>, vector<8x8xf32>
    %cst_81 = arith.constant dense<0xFF800000> : vector<8xf32>
    %141 = vector.multi_reduction <maximumf>, %140, %cst_81 [1] : vector<8x8xf32> to vector<8xf32>
    %142 = vector.shape_cast %141 : vector<8xf32> to vector<8x1xf32>
    %143 = vector.broadcast %142 : vector<8x1xf32> to vector<8x8xf32>
    %144 = arith.subf %140, %143 : vector<8x8xf32>
    %145 = math.exp %144 : vector<8x8xf32>
    %cst_82 = arith.constant dense<0.000000e+00> : vector<8xf32>
    %146 = vector.multi_reduction <add>, %145, %cst_82 [1] : vector<8x8xf32> to vector<8xf32>
    %147 = vector.shape_cast %146 : vector<8xf32> to vector<8x1xf32>
    %cst_83 = arith.constant dense<0.000000e+00> : vector<8x8xf32>
    %148 = tpu.matmul %145, %137, %cst_83 {dimension_numbers = #tpu.dot_dimension_numbers<[1], [0], [0], [1], [0, 0, 1, 1], [], []>} : vector<8x8xf32>, vector<8x8xf32>, vector<8x8xf32> -> vector<8x8xf32>
    %149 = vector.broadcast %147 : vector<8x1xf32> to vector<8x8xf32>
    %150 = arith.divf %148, %149 : vector<8x8xf32>
    %c8_84 = arith.constant 8 : index
    %c0_85 = arith.constant 0 : index
    %151 = vector.load %arg8[%c8_84, %c0_85] : memref<32x32xf32, #tpu.memory_space<vmem>>, vector<8x32xf32>
    %cst_86 = arith.constant dense<0.000000e+00> : vector<8x32xf32>
    %152 = tpu.matmul %150, %151, %cst_86 {dimension_numbers = #tpu.dot_dimension_numbers<[1], [0], [0], [1], [0, 0, 1, 1], [], []>} : vector<8x8xf32>, vector<8x32xf32>, vector<8x32xf32> -> vector<8x32xf32>
    %153 = arith.addf %134, %152 : vector<8x32xf32>
    %154 = vector.extract_strided_slice %107 {offsets = [0, 16], sizes = [8, 8], strides = [1, 1]} : vector<8x32xf32> to vector<8x8xf32>
    %155 = vector.extract_strided_slice %109 {offsets = [0, 16], sizes = [8, 8], strides = [1, 1]} : vector<8x32xf32> to vector<8x8xf32>
    %156 = vector.extract_strided_slice %111 {offsets = [0, 16], sizes = [8, 8], strides = [1, 1]} : vector<8x32xf32> to vector<8x8xf32>
    %cst_87 = arith.constant dense<0.000000e+00> : vector<8x8xf32>
    %157 = tpu.matmul %154, %155, %cst_87 {dimension_numbers = #tpu.dot_dimension_numbers<[1], [1], [0], [0], [0, 0, 1, 0], [], []>} : vector<8x8xf32>, vector<8x8xf32>, vector<8x8xf32> -> vector<8x8xf32>
    %cst_88 = arith.constant -1.000000e+06 : f32
    %158 = vector.broadcast %cst_88 : f32 to vector<8x8xf32>
    %159 = arith.select %114, %157, %158 : vector<8x8xi1>, vector<8x8xf32>
    %cst_89 = arith.constant dense<0xFF800000> : vector<8xf32>
    %160 = vector.multi_reduction <maximumf>, %159, %cst_89 [1] : vector<8x8xf32> to vector<8xf32>
    %161 = vector.shape_cast %160 : vector<8xf32> to vector<8x1xf32>
    %162 = vector.broadcast %161 : vector<8x1xf32> to vector<8x8xf32>
    %163 = arith.subf %159, %162 : vector<8x8xf32>
    %164 = math.exp %163 : vector<8x8xf32>
    %cst_90 = arith.constant dense<0.000000e+00> : vector<8xf32>
    %165 = vector.multi_reduction <add>, %164, %cst_90 [1] : vector<8x8xf32> to vector<8xf32>
    %166 = vector.shape_cast %165 : vector<8xf32> to vector<8x1xf32>
    %cst_91 = arith.constant dense<0.000000e+00> : vector<8x8xf32>
    %167 = tpu.matmul %164, %156, %cst_91 {dimension_numbers = #tpu.dot_dimension_numbers<[1], [0], [0], [1], [0, 0, 1, 1], [], []>} : vector<8x8xf32>, vector<8x8xf32>, vector<8x8xf32> -> vector<8x8xf32>
    %168 = vector.broadcast %166 : vector<8x1xf32> to vector<8x8xf32>
    %169 = arith.divf %167, %168 : vector<8x8xf32>
    %c16_92 = arith.constant 16 : index
    %c0_93 = arith.constant 0 : index
    %170 = vector.load %arg8[%c16_92, %c0_93] : memref<32x32xf32, #tpu.memory_space<vmem>>, vector<8x32xf32>
    %cst_94 = arith.constant dense<0.000000e+00> : vector<8x32xf32>
    %171 = tpu.matmul %169, %170, %cst_94 {dimension_numbers = #tpu.dot_dimension_numbers<[1], [0], [0], [1], [0, 0, 1, 1], [], []>} : vector<8x8xf32>, vector<8x32xf32>, vector<8x32xf32> -> vector<8x32xf32>
    %172 = arith.addf %153, %171 : vector<8x32xf32>
    %173 = vector.extract_strided_slice %107 {offsets = [0, 24], sizes = [8, 8], strides = [1, 1]} : vector<8x32xf32> to vector<8x8xf32>
    %174 = vector.extract_strided_slice %109 {offsets = [0, 24], sizes = [8, 8], strides = [1, 1]} : vector<8x32xf32> to vector<8x8xf32>
    %175 = vector.extract_strided_slice %111 {offsets = [0, 24], sizes = [8, 8], strides = [1, 1]} : vector<8x32xf32> to vector<8x8xf32>
    %cst_95 = arith.constant dense<0.000000e+00> : vector<8x8xf32>
    %176 = tpu.matmul %173, %174, %cst_95 {dimension_numbers = #tpu.dot_dimension_numbers<[1], [1], [0], [0], [0, 0, 1, 0], [], []>} : vector<8x8xf32>, vector<8x8xf32>, vector<8x8xf32> -> vector<8x8xf32>
    %cst_96 = arith.constant -1.000000e+06 : f32
    %177 = vector.broadcast %cst_96 : f32 to vector<8x8xf32>
    %178 = arith.select %114, %176, %177 : vector<8x8xi1>, vector<8x8xf32>
    %cst_97 = arith.constant dense<0xFF800000> : vector<8xf32>
    %179 = vector.multi_reduction <maximumf>, %178, %cst_97 [1] : vector<8x8xf32> to vector<8xf32>
    %180 = vector.shape_cast %179 : vector<8xf32> to vector<8x1xf32>
    %181 = vector.broadcast %180 : vector<8x1xf32> to vector<8x8xf32>
    %182 = arith.subf %178, %181 : vector<8x8xf32>
    %183 = math.exp %182 : vector<8x8xf32>
    %cst_98 = arith.constant dense<0.000000e+00> : vector<8xf32>
    %184 = vector.multi_reduction <add>, %183, %cst_98 [1] : vector<8x8xf32> to vector<8xf32>
    %185 = vector.shape_cast %184 : vector<8xf32> to vector<8x1xf32>
    %cst_99 = arith.constant dense<0.000000e+00> : vector<8x8xf32>
    %186 = tpu.matmul %183, %175, %cst_99 {dimension_numbers = #tpu.dot_dimension_numbers<[1], [0], [0], [1], [0, 0, 1, 1], [], []>} : vector<8x8xf32>, vector<8x8xf32>, vector<8x8xf32> -> vector<8x8xf32>
    %187 = vector.broadcast %185 : vector<8x1xf32> to vector<8x8xf32>
    %188 = arith.divf %186, %187 : vector<8x8xf32>
    %c24_100 = arith.constant 24 : index
    %c0_101 = arith.constant 0 : index
    %189 = vector.load %arg8[%c24_100, %c0_101] : memref<32x32xf32, #tpu.memory_space<vmem>>, vector<8x32xf32>
    %cst_102 = arith.constant dense<0.000000e+00> : vector<8x32xf32>
    %190 = tpu.matmul %188, %189, %cst_102 {dimension_numbers = #tpu.dot_dimension_numbers<[1], [0], [0], [1], [0, 0, 1, 1], [], []>} : vector<8x8xf32>, vector<8x32xf32>, vector<8x32xf32> -> vector<8x32xf32>
    %191 = arith.addf %172, %190 : vector<8x32xf32>
    %c1_103 = arith.constant 1 : index
    %c0_104 = arith.constant 0 : index
    %c0_105 = arith.constant 0 : index
    %192 = vector.load %arg9[%c1_103, %c0_104, %c0_105] : memref<2x8x32xf32, #tpu.memory_space<vmem>>, vector<1x8x32xf32>
    %193 = vector.shape_cast %192 : vector<1x8x32xf32> to vector<8x32xf32>
    %194 = vector.shape_cast %191 : vector<8x32xf32> to vector<1x8x32xf32>
    tpu.vector_store %arg9[%c1_103, %c0_104, %c0_105], %194 {strides = array<i32>} : memref<2x8x32xf32, #tpu.memory_space<vmem>>, vector<1x8x32xf32>,
    return
  }
  func.func @transform_0(%arg0: i32, %arg1: memref<2xi32, #tpu.memory_space<smem>>) -> (i32, i32, i32) {
    %c0_i32 = arith.constant 0 : i32
    %c0_i32_0 = arith.constant 0 : i32
    %c0_i32_1 = arith.constant 0 : i32
    %c0_i32_2 = arith.constant 0 : i32
    return %c0_i32, %c0_i32_0, %c0_i32_1 : i32, i32, i32
  }
  func.func @transform_1(%arg0: i32, %arg1: memref<2xi32, #tpu.memory_space<smem>>) -> (i32, i32, i32) {
    %c0_i32 = arith.constant 0 : i32
    %c0_i32_0 = arith.constant 0 : i32
    %c0_i32_1 = arith.constant 0 : i32
    %c0_i32_2 = arith.constant 0 : i32
    return %c0_i32, %c0_i32_0, %c0_i32_1 : i32, i32, i32
  }
  func.func @transform_2(%arg0: i32, %arg1: memref<2xi32, #tpu.memory_space<smem>>) -> (i32, i32, i32) {
    %c0_i32 = arith.constant 0 : i32
    %c0_i32_0 = arith.constant 0 : i32
    %c0_i32_1 = arith.constant 0 : i32
    %c0_i32_2 = arith.constant 0 : i32
    return %c0_i32, %c0_i32_0, %c0_i32_1 : i32, i32, i32
  }
  func.func @transform_3(%arg0: i32, %arg1: memref<2xi32, #tpu.memory_space<smem>>) -> (i32, i32) {
    %c0_i32 = arith.constant 0 : i32
    %c0_i32_0 = arith.constant 0 : i32
    %c0_i32_1 = arith.constant 0 : i32
    return %c0_i32, %c0_i32_0 : i32, i32
  }
  func.func @transform_4(%arg0: i32, %arg1: memref<2xi32, #tpu.memory_space<smem>>) -> (i32, i32) {
    %c0_i32 = arith.constant 0 : i32
    %c0_i32_0 = arith.constant 0 : i32
    %c0_i32_1 = arith.constant 0 : i32
    return %c0_i32, %c0_i32_0 : i32, i32
  }
  func.func @transform_5(%arg0: i32, %arg1: memref<2xi32, #tpu.memory_space<smem>>) -> (i32, i32) {
    %c0_i32 = arith.constant 0 : i32
    %c0_i32_0 = arith.constant 0 : i32
    %c0_i32_1 = arith.constant 0 : i32
    return %c0_i32, %c0_i32_0 : i32, i32
  }
  func.func @transform_6(%arg0: i32, %arg1: memref<2xi32, #tpu.memory_space<smem>>) -> (i32, i32) {
    %c0_i32 = arith.constant 0 : i32
    %c0_i32_0 = arith.constant 0 : i32
    %c0_i32_1 = arith.constant 0 : i32
    return %c0_i32, %c0_i32_0 : i32, i32
  }
  func.func @transform_7(%arg0: i32, %arg1: memref<2xi32, #tpu.memory_space<smem>>) -> (i32, i32, i32) {
    %c0_i32 = arith.constant 0 : i32
    %c0_i32_0 = arith.constant 0 : i32
    %c0_i32_1 = arith.constant 0 : i32
    %c0_i32_2 = arith.constant 0 : i32
    return %c0_i32, %c0_i32_0, %c0_i32_1 : i32, i32, i32
  }
}

</mosaic_0001>

<llo_original>
// kernel: tpu_custom_call.1
$region0: #{tpu_custom_call.1}
  #allocation0 [shape = 'u32[]', space=smem, size = 0x4, offset = 0x4, fixed_abs, tag = 'smem constant byte address 0x4 - core index']
  #allocation1 [shape = 'u32[144,128]{1,0:T(1,128)}', space=vmem, size = 0x12000, scoped, tag = 'internal scratch']
  #allocation2 [shape = 's32[1]{0}', space=sflag, size = 0x4, scoped, tag = 'scoped memory for tpu_custom_call.1']
  #allocation3 [shape = 'u8[512]{0}', space=smem, size = 0x200, scoped, tag = 'prefetched SMEM operand 0']
  %s0 = inlined_call_operand.hbm [shape: s32[2], index: 0, kind: input, shape index: {}]
  %s1 = inlined_call_operand.hbm [shape: f32[2,8,16], index: 1, kind: input, shape index: {}]
  %s2 = inlined_call_operand.hbm [shape: f32[2,8,16], index: 2, kind: input, shape index: {}]
  %s3 = inlined_call_operand.hbm [shape: f32[2,8,16], index: 3, kind: input, shape index: {}]
  %s4 = inlined_call_operand.hbm [shape: f32[16,32], index: 4, kind: input, shape index: {}]
  %s5 = inlined_call_operand.vmem [shape: f32[16,32], index: 5, kind: input, shape index: {}]
  %s6 = inlined_call_operand.hbm [shape: f32[16,32], index: 6, kind: input, shape index: {}]
  %s7 = inlined_call_operand.hbm [shape: f32[32,32], index: 7, kind: input, shape index: {}]
  %s8 = inlined_call_operand.hbm [shape: f32[2,8,32], index: 8, kind: output, shape index: {}]
  %s9 = sld [smem:[#allocation0]]
  $region62: #{tpu_custom_call.1} parent=0
    _
  %s11 = ssub.s32 1, %s9
  %s12 = scalar_select 0, %s11, %s9
  %14 = dma.hbm_to_smem %s0, 16, [#allocation3], [#allocation2]
  %15 = dma.done [#allocation2], 16
  %16 = sfence
  $region1: #{tpu_custom_call.1} parent=0
    #allocation4 [shape = 'u8[8192]{0}', space=vmem, size = 0x2000, scoped, tag = 'input window, operand 1, single buffered']
    #allocation5 [shape = 's32[1]{0}', space=sflag, size = 0x4, scoped, tag = 'scoped memory for tpu_custom_call.1']
    #allocation6 [shape = 's32[1]{0}', space=sflag, size = 0x4, scoped, tag = 'scoped memory for tpu_custom_call.1']
    #allocation7 [shape = 'u8[8192]{0}', space=vmem, size = 0x2000, scoped, tag = 'input window, operand 2, single buffered']
    #allocation8 [shape = 's32[1]{0}', space=sflag, size = 0x4, scoped, tag = 'scoped memory for tpu_custom_call.1']
    #allocation9 [shape = 'u8[8192]{0}', space=vmem, size = 0x2000, scoped, tag = 'input window, operand 3, single buffered']
    #allocation10 [shape = 'u8[8192]{0}', space=vmem, size = 0x2000, scoped, tag = 'input window, operand 4, single buffered']
    #allocation11 [shape = 's32[1]{0}', space=sflag, size = 0x4, scoped, tag = 'scoped memory for tpu_custom_call.1']
    #allocation12 [shape = 'u8[8192]{0}', space=vmem, size = 0x2000, scoped, tag = 'input window, operand 6, single buffered']
    #allocation13 [shape = 'u8[16384]{0}', space=vmem, size = 0x4000, scoped, tag = 'input window, operand 7, single buffered']
    #allocation14 [shape = 's32[1]{0}', space=sflag, size = 0x4, scoped, tag = 'scoped memory for tpu_custom_call.1']
    #allocation15 [shape = 'u8[8192]{0}', space=vmem, size = 0x2000, scoped, tag = 'output window, operand 0, single buffered']
    %17 = vsyncpa [#allocation5], 0
    %18 = vsyncpa [#allocation8], 0
    %19 = vsyncpa [#allocation11], 0
    %20 = vsyncpa [#allocation14], 0
    %21 = vsyncpa [#allocation6], 0
    // Predicated region
    $region2: #{tpu_custom_call.1} parent=1 // pred_check
      _
    $region3: #{tpu_custom_call.1} parent=1 // pred_check_branch
      %23 = sbr.rel (0) target = $region5
    $region4: #{tpu_custom_call.1} parent=1 // pred_region
      %s25 = ssub.s32 256, 256
      %26 = vsyncadd [#allocation5], %s25
      %s27 = sshll.u32 [#allocation4], 4
      %s28 = int_to_ptr.vmem [resolvable:$true] %s27
      %33 = dma.hbm_to_vmem [thread:$0]  %s1, 256, %s28, [#allocation5], 128, 128, 8
    $region5: #{tpu_custom_call.1} parent=1 // pred_fallthru
      _
    // Predicated region
    $region6: #{tpu_custom_call.1} parent=1 // pred_check
      _
    $region7: #{tpu_custom_call.1} parent=1 // pred_check_branch
      %35 = sbr.rel (0) target = $region9
    $region8: #{tpu_custom_call.1} parent=1 // pred_region
      %s37 = ssub.s32 256, 256
      %38 = vsyncadd [#allocation8], %s37
      %s39 = sshll.u32 [#allocation7], 4
      %s40 = int_to_ptr.vmem [resolvable:$true] %s39
      %45 = dma.hbm_to_vmem [thread:$0]  %s2, 256, %s40, [#allocation8], 128, 128, 8
    $region9: #{tpu_custom_call.1} parent=1 // pred_fallthru
      _
    // Predicated region
    $region10: #{tpu_custom_call.1} parent=1 // pred_check
      _
    $region11: #{tpu_custom_call.1} parent=1 // pred_check_branch
      %47 = sbr.rel (0) target = $region13
    $region12: #{tpu_custom_call.1} parent=1 // pred_region
      %s49 = ssub.s32 256, 256
      %50 = vsyncadd [#allocation8], %s49
      %s51 = sshll.u32 [#allocation9], 4
      %s52 = int_to_ptr.vmem [resolvable:$true] %s51
      %57 = dma.hbm_to_vmem [thread:$0]  %s3, 256, %s52, [#allocation8], 128, 128, 8
    $region13: #{tpu_custom_call.1} parent=1 // pred_fallthru
      _
    // Predicated region
    $region14: #{tpu_custom_call.1} parent=1 // pred_check
      _
    $region15: #{tpu_custom_call.1} parent=1 // pred_check_branch
      %59 = sbr.rel (0) target = $region17
    $region16: #{tpu_custom_call.1} parent=1 // pred_region
      %s61 = ssub.s32 256, 256
      %62 = vsyncadd [#allocation11], %s61
      %s63 = sshll.u32 [#allocation10], 4
      %s64 = int_to_ptr.vmem [resolvable:$true] %s63
      %69 = dma.hbm_to_vmem [thread:$0]  %s4, 256, %s64, [#allocation11], 128, 128, 8
    $region17: #{tpu_custom_call.1} parent=1 // pred_fallthru
      _
    // Predicated region
    $region18: #{tpu_custom_call.1} parent=1 // pred_check
      _
    $region19: #{tpu_custom_call.1} parent=1 // pred_check_branch
      %71 = sbr.rel (0) target = $region21
    $region20: #{tpu_custom_call.1} parent=1 // pred_region
      _
    $region21: #{tpu_custom_call.1} parent=1 // pred_fallthru
      _
    // Predicated region
    $region22: #{tpu_custom_call.1} parent=1 // pred_check
      _
    $region23: #{tpu_custom_call.1} parent=1 // pred_check_branch
      %73 = sbr.rel (0) target = $region25
    $region24: #{tpu_custom_call.1} parent=1 // pred_region
      %s75 = ssub.s32 256, 256
      %76 = vsyncadd [#allocation11], %s75
      %s77 = sshll.u32 [#allocation12], 4
      %s78 = int_to_ptr.vmem [resolvable:$true] %s77
      %83 = dma.hbm_to_vmem [thread:$0]  %s6, 256, %s78, [#allocation11], 128, 128, 8
    $region25: #{tpu_custom_call.1} parent=1 // pred_fallthru
      _
    // Predicated region
    $region26: #{tpu_custom_call.1} parent=1 // pred_check
      _
    $region27: #{tpu_custom_call.1} parent=1 // pred_check_branch
      %85 = sbr.rel (0) target = $region29
    $region28: #{tpu_custom_call.1} parent=1 // pred_region
      %s87 = ssub.s32 512, 512
      %88 = vsyncadd [#allocation14], %s87
      %s89 = sshll.u32 [#allocation13], 4
      %s90 = int_to_ptr.vmem [resolvable:$true] %s89
      %95 = dma.hbm_to_vmem [thread:$0]  %s7, 512, %s90, [#allocation14], 128, 128, 8
    $region29: #{tpu_custom_call.1} parent=1 // pred_fallthru
      _
    // Predicated region
    $region30: #{tpu_custom_call.1} parent=1 // pred_check
      _
    $region31: #{tpu_custom_call.1} parent=1 // pred_check_branch
      %97 = sbr.rel (0) target = $region33
    $region32: #{tpu_custom_call.1} parent=1 // pred_region
      %98 = dma.done [#allocation5], 256
    $region33: #{tpu_custom_call.1} parent=1 // pred_fallthru
      _
    // Predicated region
    $region34: #{tpu_custom_call.1} parent=1 // pred_check
      _
    $region35: #{tpu_custom_call.1} parent=1 // pred_check_branch
      %100 = sbr.rel (0) target = $region37
    $region36: #{tpu_custom_call.1} parent=1 // pred_region
      %101 = dma.done [#allocation8], 256
    $region37: #{tpu_custom_call.1} parent=1 // pred_fallthru
      _
    // Predicated region
    $region38: #{tpu_custom_call.1} parent=1 // pred_check
      _
    $region39: #{tpu_custom_call.1} parent=1 // pred_check_branch
      %103 = sbr.rel (0) target = $region41
    $region40: #{tpu_custom_call.1} parent=1 // pred_region
      %104 = dma.done [#allocation8], 256
    $region41: #{tpu_custom_call.1} parent=1 // pred_fallthru
      _
    // Predicated region
    $region42: #{tpu_custom_call.1} parent=1 // pred_check
      _
    $region43: #{tpu_custom_call.1} parent=1 // pred_check_branch
      %106 = sbr.rel (0) target = $region45
    $region44: #{tpu_custom_call.1} parent=1 // pred_region
      %107 = dma.done [#allocation11], 256
    $region45: #{tpu_custom_call.1} parent=1 // pred_fallthru
      _
    // Predicated region
    $region46: #{tpu_custom_call.1} parent=1 // pred_check
      _
    $region47: #{tpu_custom_call.1} parent=1 // pred_check_branch
      %109 = sbr.rel (0) target = $region49
    $region48: #{tpu_custom_call.1} parent=1 // pred_region
      %110 = dma.done [#allocation11], 256
    $region49: #{tpu_custom_call.1} parent=1 // pred_fallthru
      _
    // Predicated region
    $region50: #{tpu_custom_call.1} parent=1 // pred_check
      _
    $region51: #{tpu_custom_call.1} parent=1 // pred_check_branch
      %112 = sbr.rel (0) target = $region53
    $region52: #{tpu_custom_call.1} parent=1 // pred_region
      %113 = dma.done [#allocation14], 512
    $region53: #{tpu_custom_call.1} parent=1 // pred_fallthru
      _
    %v114 = vlaneseq
    %v115 = vand.u32 %v114, 127
    %v116 = vld [vmem:[#allocation4] sm:$0xff]
    %v117 = vld [vmem:[#allocation7] sm:$0xff]
    %v118 = vld [vmem:[#allocation9] sm:$0xff]
    %v119 = vld [vmem:[#allocation10] sm:$0xff]
    %v120 = vld [vmem:[#allocation10 + $0x8] sm:$0xff]
    %vm121 = vcmask 130048
    %v123 = vsel %vm121, %v116, 0
    %125 = vmatprep.subr.mxu0 0.0
    %126 = vmatpush1.msra.mxu0 %v119
    %127 = vmatprep.subr.mxu0 0.0
    %128 = vmatpush1.msra.mxu0 %v120
    %129 = vmatprep.subr.mxu0 0.0
    %130 = vmatpush1.msra.mxu0 0.0
    %131 = vmatprep.subr.mxu0 0.0
    %132 = vmatpush1.msra.mxu0 0.0
    %133 = vmatprep.subr.mxu0 0.0
    %134 = vmatpush1.msra.mxu0 0.0
    %135 = vmatprep.subr.mxu0 0.0
    %136 = vmatpush1.msra.mxu0 0.0
    %137 = vmatprep.subr.mxu0 0.0
    %138 = vmatpush1.msra.mxu0 0.0
    %139 = vmatprep.subr.mxu0 0.0
    %140 = vmatpush1.msra.mxu0 0.0
    %141 = vmatprep.subr.mxu0 0.0
    %142 = vmatpush1.msra.mxu0 0.0
    %143 = vmatprep.subr.mxu0 0.0
    %144 = vmatpush1.msra.mxu0 0.0
    %145 = vmatprep.subr.mxu0 0.0
    %146 = vmatpush1.msra.mxu0 0.0
    %147 = vmatprep.subr.mxu0 0.0
    %148 = vmatpush1.msra.mxu0 0.0
    %149 = vmatprep.subr.mxu0 0.0
    %150 = vmatpush1.msra.mxu0 0.0
    %151 = vmatprep.subr.mxu0 0.0
    %152 = vmatpush1.msra.mxu0 0.0
    %153 = vmatprep.subr.mxu0 0.0
    %154 = vmatpush1.msra.mxu0 0.0
    %155 = vmatprep.subr.mxu0 0.0
    %156 = vmatpush1.msra.mxu0 0.0
    %157 = vmatprep.subr.mxu0 0.0
    %158 = vmatpush1.msra.mxu0 0.0
    %159 = vmatprep.subr.mxu0 0.0
    %160 = vmatpush1.msra.mxu0 0.0
    %161 = vmatprep.subr.mxu0 0.0
    %162 = vmatpush1.msra.mxu0 0.0
    %163 = vmatprep.subr.mxu0 0.0
    %164 = vmatpush1.msra.mxu0 0.0
    %165 = vmatprep.subr.mxu0 0.0
    %166 = vmatpush1.msra.mxu0 0.0
    %167 = vmatprep.subr.mxu0 0.0
    %168 = vmatpush1.msra.mxu0 0.0
    %169 = vmatprep.subr.mxu0 0.0
    %170 = vmatpush1.msra.mxu0 0.0
    %171 = vmatprep.subr.mxu0 0.0
    %172 = vmatpush1.msra.mxu0 0.0
    %173 = vmatprep.subr.mxu0 0.0
    %174 = vmatpush1.msra.mxu0 0.0
    %175 = vmatprep.subr.mxu0 0.0
    %176 = vmatpush1.msra.mxu0 0.0
    %177 = vmatprep.subr.mxu0 0.0
    %178 = vmatpush1.msra.mxu0 0.0
    %179 = vmatprep.subr.mxu0 0.0
    %180 = vmatpush1.msra.mxu0 0.0
    %181 = vmatprep.subr.mxu0 0.0
    %182 = vmatpush1.msra.mxu0 0.0
    %183 = vmatprep.subr.mxu0 0.0
    %184 = vmatpush1.msra.mxu0 0.0
    %185 = vmatprep.subr.mxu0 0.0
    %186 = vmatpush1.msra.mxu0 0.0
    %187 = vmatprep.subr.mxu0 0.0
    %188 = vmatpush1.msra.mxu0 0.0
    %189 = vmatprep.mubr.f32.mxu0 0.0
    %190 = vmatmul.mubr.f32.gmra.mrb[0].mxu0 %v123
    %v191 = vpop.f32.mrb[0].mxu0
    %v192 = vadd.f32 0.0, %v191
    %v193 = vpop.f32.mrb[0].mxu0
    %194 = vdwg.mxu0
    %v195 = vmul.f32 %v192, 0.35355338
    %v196 = vld [vmem:[%s5] sm:$0xff]
    %v197 = vld [vmem:[%s5 + $0x8] sm:$0xff]
    %v199 = vsel %vm121, %v117, 0
    %201 = vmatprep.subr.mxu0 0.0
    %202 = vmatpush1.msra.mxu0 %v196
    %203 = vmatprep.subr.mxu0 0.0
    %204 = vmatpush1.msra.mxu0 %v197
    %205 = vmatprep.subr.mxu0 0.0
    %206 = vmatpush1.msra.mxu0 0.0
    %207 = vmatprep.subr.mxu0 0.0
    %208 = vmatpush1.msra.mxu0 0.0
    %209 = vmatprep.subr.mxu0 0.0
    %210 = vmatpush1.msra.mxu0 0.0
    %211 = vmatprep.subr.mxu0 0.0
    %212 = vmatpush1.msra.mxu0 0.0
    %213 = vmatprep.subr.mxu0 0.0
    %214 = vmatpush1.msra.mxu0 0.0
    %215 = vmatprep.subr.mxu0 0.0
    %216 = vmatpush1.msra.mxu0 0.0
    %217 = vmatprep.subr.mxu0 0.0
    %218 = vmatpush1.msra.mxu0 0.0
    %219 = vmatprep.subr.mxu0 0.0
    %220 = vmatpush1.msra.mxu0 0.0
    %221 = vmatprep.subr.mxu0 0.0
    %222 = vmatpush1.msra.mxu0 0.0
    %223 = vmatprep.subr.mxu0 0.0
    %224 = vmatpush1.msra.mxu0 0.0
    %225 = vmatprep.subr.mxu0 0.0
    %226 = vmatpush1.msra.mxu0 0.0
    %227 = vmatprep.subr.mxu0 0.0
    %228 = vmatpush1.msra.mxu0 0.0
    %229 = vmatprep.subr.mxu0 0.0
    %230 = vmatpush1.msra.mxu0 0.0
    %231 = vmatprep.subr.mxu0 0.0
    %232 = vmatpush1.msra.mxu0 0.0
    %233 = vmatprep.subr.mxu0 0.0
    %234 = vmatpush1.msra.mxu0 0.0
    %235 = vmatprep.subr.mxu0 0.0
    %236 = vmatpush1.msra.mxu0 0.0
    %237 = vmatprep.subr.mxu0 0.0
    %238 = vmatpush1.msra.mxu0 0.0
    %239 = vmatprep.subr.mxu0 0.0
    %240 = vmatpush1.msra.mxu0 0.0
    %241 = vmatprep.subr.mxu0 0.0
    %242 = vmatpush1.msra.mxu0 0.0
    %243 = vmatprep.subr.mxu0 0.0
    %244 = vmatpush1.msra.mxu0 0.0
    %245 = vmatprep.subr.mxu0 0.0
    %246 = vmatpush1.msra.mxu0 0.0
    %247 = vmatprep.subr.mxu0 0.0
    %248 = vmatpush1.msra.mxu0 0.0
    %249 = vmatprep.subr.mxu0 0.0
    %250 = vmatpush1.msra.mxu0 0.0
    %251 = vmatprep.subr.mxu0 0.0
    %252 = vmatpush1.msra.mxu0 0.0
    %253 = vmatprep.subr.mxu0 0.0
    %254 = vmatpush1.msra.mxu0 0.0
    %255 = vmatprep.subr.mxu0 0.0
    %256 = vmatpush1.msra.mxu0 0.0
    %257 = vmatprep.subr.mxu0 0.0
    %258 = vmatpush1.msra.mxu0 0.0
    %259 = vmatprep.subr.mxu0 0.0
    %260 = vmatpush1.msra.mxu0 0.0
    %261 = vmatprep.subr.mxu0 0.0
    %262 = vmatpush1.msra.mxu0 0.0
    %263 = vmatprep.subr.mxu0 0.0
    %264 = vmatpush1.msra.mxu0 0.0
    %265 = vmatprep.mubr.f32.mxu0 0.0
    %266 = vmatmul.mubr.f32.gmra.mrb[0].mxu0 %v199
    %v267 = vpop.f32.mrb[0].mxu0
    %v268 = vadd.f32 0.0, %v267
    %v269 = vpop.f32.mrb[0].mxu0
    %270 = vdwg.mxu0
    %v271 = vld [vmem:[#allocation12] sm:$0xff]
    %v272 = vld [vmem:[#allocation12 + $0x8] sm:$0xff]
    %v274 = vsel %vm121, %v118, 0
    %276 = vmatprep.subr.mxu0 0.0
    %277 = vmatpush1.msra.mxu0 %v271
    %278 = vmatprep.subr.mxu0 0.0
    %279 = vmatpush1.msra.mxu0 %v272
    %280 = vmatprep.subr.mxu0 0.0
    %281 = vmatpush1.msra.mxu0 0.0
    %282 = vmatprep.subr.mxu0 0.0
    %283 = vmatpush1.msra.mxu0 0.0
    %284 = vmatprep.subr.mxu0 0.0
    %285 = vmatpush1.msra.mxu0 0.0
    %286 = vmatprep.subr.mxu0 0.0
    %287 = vmatpush1.msra.mxu0 0.0
    %288 = vmatprep.subr.mxu0 0.0
    %289 = vmatpush1.msra.mxu0 0.0
    %290 = vmatprep.subr.mxu0 0.0
    %291 = vmatpush1.msra.mxu0 0.0
    %292 = vmatprep.subr.mxu0 0.0
    %293 = vmatpush1.msra.mxu0 0.0
    %294 = vmatprep.subr.mxu0 0.0
    %295 = vmatpush1.msra.mxu0 0.0
    %296 = vmatprep.subr.mxu0 0.0
    %297 = vmatpush1.msra.mxu0 0.0
    %298 = vmatprep.subr.mxu0 0.0
    %299 = vmatpush1.msra.mxu0 0.0
    %300 = vmatprep.subr.mxu0 0.0
    %301 = vmatpush1.msra.mxu0 0.0
    %302 = vmatprep.subr.mxu0 0.0
    %303 = vmatpush1.msra.mxu0 0.0
    %304 = vmatprep.subr.mxu0 0.0
    %305 = vmatpush1.msra.mxu0 0.0
    %306 = vmatprep.subr.mxu0 0.0
    %307 = vmatpush1.msra.mxu0 0.0
    %308 = vmatprep.subr.mxu0 0.0
    %309 = vmatpush1.msra.mxu0 0.0
    %310 = vmatprep.subr.mxu0 0.0
    %311 = vmatpush1.msra.mxu0 0.0
    %312 = vmatprep.subr.mxu0 0.0
    %313 = vmatpush1.msra.mxu0 0.0
    %314 = vmatprep.subr.mxu0 0.0
    %315 = vmatpush1.msra.mxu0 0.0
    %316 = vmatprep.subr.mxu0 0.0
    %317 = vmatpush1.msra.mxu0 0.0
    %318 = vmatprep.subr.mxu0 0.0
    %319 = vmatpush1.msra.mxu0 0.0
    %320 = vmatprep.subr.mxu0 0.0
    %321 = vmatpush1.msra.mxu0 0.0
    %322 = vmatprep.subr.mxu0 0.0
    %323 = vmatpush1.msra.mxu0 0.0
    %324 = vmatprep.subr.mxu0 0.0
    %325 = vmatpush1.msra.mxu0 0.0
    %326 = vmatprep.subr.mxu0 0.0
    %327 = vmatpush1.msra.mxu0 0.0
    %328 = vmatprep.subr.mxu0 0.0
    %329 = vmatpush1.msra.mxu0 0.0
    %330 = vmatprep.subr.mxu0 0.0
    %331 = vmatpush1.msra.mxu0 0.0
    %332 = vmatprep.subr.mxu0 0.0
    %333 = vmatpush1.msra.mxu0 0.0
    %334 = vmatprep.subr.mxu0 0.0
    %335 = vmatpush1.msra.mxu0 0.0
    %336 = vmatprep.subr.mxu0 0.0
    %337 = vmatpush1.msra.mxu0 0.0
    %338 = vmatprep.subr.mxu0 0.0
    %339 = vmatpush1.msra.mxu0 0.0
    %340 = vmatprep.mubr.f32.mxu0 0.0
    %341 = vmatmul.mubr.f32.gmra.mrb[0].mxu0 %v274
    %v342 = vpop.f32.mrb[0].mxu0
    %v343 = vadd.f32 0.0, %v342
    %v344 = vpop.f32.mrb[0].mxu0
    %345 = vdwg.mxu0
    %s346 = sld [smem:[#allocation3]]
    %v347 = vstv %s346
    %vm348 = vcmp.lt.s32.totalorder %v115, %v347
    %vm349 = vcmask 64512
    %v351 = vsel %vm349, %v195, 0
    %v354 = vsel %vm349, %v268, 0
    %356 = vmatprep.subr.mxu0 0.0
    %357 = vmatpush1.xpose.msra.mxu0 %v354
    %358 = vmatprep.subr.mxu0 0.0
    %359 = vmatpush1.xpose.msra.mxu0 0.0
    %360 = vmatprep.subr.mxu0 0.0
    %361 = vmatpush1.xpose.msra.mxu0 0.0
    %362 = vmatprep.subr.mxu0 0.0
    %363 = vmatpush1.xpose.msra.mxu0 0.0
    %364 = vmatprep.subr.mxu0 0.0
    %365 = vmatpush1.xpose.msra.mxu0 0.0
    %366 = vmatprep.subr.mxu0 0.0
    %367 = vmatpush1.xpose.msra.mxu0 0.0
    %368 = vmatprep.subr.mxu0 0.0
    %369 = vmatpush1.xpose.msra.mxu0 0.0
    %370 = vmatprep.subr.mxu0 0.0
    %371 = vmatpush1.xpose.msra.mxu0 0.0
    %372 = vmatprep.subr.mxu0 0.0
    %373 = vmatpush1.xpose.msra.mxu0 0.0
    %374 = vmatprep.subr.mxu0 0.0
    %375 = vmatpush1.xpose.msra.mxu0 0.0
    %376 = vmatprep.subr.mxu0 0.0
    %377 = vmatpush1.xpose.msra.mxu0 0.0
    %378 = vmatprep.subr.mxu0 0.0
    %379 = vmatpush1.xpose.msra.mxu0 0.0
    %380 = vmatprep.subr.mxu0 0.0
    %381 = vmatpush1.xpose.msra.mxu0 0.0
    %382 = vmatprep.subr.mxu0 0.0
    %383 = vmatpush1.xpose.msra.mxu0 0.0
    %384 = vmatprep.subr.mxu0 0.0
    %385 = vmatpush1.xpose.msra.mxu0 0.0
    %386 = vmatprep.subr.mxu0 0.0
    %387 = vmatpush1.xpose.msra.mxu0 0.0
    %388 = vmatprep.subr.mxu0 0.0
    %389 = vmatpush1.xpose.msra.mxu0 0.0
    %390 = vmatprep.subr.mxu0 0.0
    %391 = vmatpush1.xpose.msra.mxu0 0.0
    %392 = vmatprep.subr.mxu0 0.0
    %393 = vmatpush1.xpose.msra.mxu0 0.0
    %394 = vmatprep.subr.mxu0 0.0
    %395 = vmatpush1.xpose.msra.mxu0 0.0
    %396 = vmatprep.subr.mxu0 0.0
    %397 = vmatpush1.xpose.msra.mxu0 0.0
    %398 = vmatprep.subr.mxu0 0.0
    %399 = vmatpush1.xpose.msra.mxu0 0.0
    %400 = vmatprep.subr.mxu0 0.0
    %401 = vmatpush1.xpose.msra.mxu0 0.0
    %402 = vmatprep.subr.mxu0 0.0
    %403 = vmatpush1.xpose.msra.mxu0 0.0
    %404 = vmatprep.subr.mxu0 0.0
    %405 = vmatpush1.xpose.msra.mxu0 0.0
    %406 = vmatprep.subr.mxu0 0.0
    %407 = vmatpush1.xpose.msra.mxu0 0.0
    %408 = vmatprep.subr.mxu0 0.0
    %409 = vmatpush1.xpose.msra.mxu0 0.0
    %410 = vmatprep.subr.mxu0 0.0
    %411 = vmatpush1.xpose.msra.mxu0 0.0
    %412 = vmatprep.subr.mxu0 0.0
    %413 = vmatpush1.xpose.msra.mxu0 0.0
    %414 = vmatprep.subr.mxu0 0.0
    %415 = vmatpush1.xpose.msra.mxu0 0.0
    %416 = vmatprep.subr.mxu0 0.0
    %417 = vmatpush1.xpose.msra.mxu0 0.0
    %418 = vmatprep.subr.mxu0 0.0
    %419 = vmatpush1.xpose.msra.mxu0 0.0
    %420 = vmatprep.mubr.f32.mxu0 0.0
    %421 = vmatmul.mubr.f32.gmra.mrb[0].mxu0 %v351
    %v422 = vpop.f32.mrb[0].mxu0
    %v423 = vadd.f32 0.0, %v422
    %v424 = vpop.f32.mrb[0].mxu0
    %425 = vdwg.mxu0
    %v426 = vsel %vm348, %v423, -1000000.0
    %v427 = vsel %vm349, %v426, -inf
    %428 = vmax.xlane.f32.xlu0 %v427
    %v429 = vpop.xlane.xlu0 %428
    %v430 = vsub.f32 %v426, %v429
    %v431 = vmul.f32 %v430, 1.442695
    %v432 = vpow.pop %v431
    %v433 = vsel %vm349, %v432, 0.0
    %434 = vadd.xlane.f32.xlu0 %v433
    %v435 = vpop.xlane.xlu0 %434
    %v437 = vsel %vm349, %v432, 0
    %439 = vmatprep.subr.mxu0 0.0
    %440 = vmatpush1.msra.mxu0 %v343
    %441 = vmatprep.subr.mxu0 0.0
    %442 = vmatpush1.msra.mxu0 0.0
    %443 = vmatprep.subr.mxu0 0.0
    %444 = vmatpush1.msra.mxu0 0.0
    %445 = vmatprep.subr.mxu0 0.0
    %446 = vmatpush1.msra.mxu0 0.0
    %447 = vmatprep.subr.mxu0 0.0
    %448 = vmatpush1.msra.mxu0 0.0
    %449 = vmatprep.subr.mxu0 0.0
    %450 = vmatpush1.msra.mxu0 0.0
    %451 = vmatprep.subr.mxu0 0.0
    %452 = vmatpush1.msra.mxu0 0.0
    %453 = vmatprep.subr.mxu0 0.0
    %454 = vmatpush1.msra.mxu0 0.0
    %455 = vmatprep.subr.mxu0 0.0
    %456 = vmatpush1.msra.mxu0 0.0
    %457 = vmatprep.subr.mxu0 0.0
    %458 = vmatpush1.msra.mxu0 0.0
    %459 = vmatprep.subr.mxu0 0.0
    %460 = vmatpush1.msra.mxu0 0.0
    %461 = vmatprep.subr.mxu0 0.0
    %462 = vmatpush1.msra.mxu0 0.0
    %463 = vmatprep.subr.mxu0 0.0
    %464 = vmatpush1.msra.mxu0 0.0
    %465 = vmatprep.subr.mxu0 0.0
    %466 = vmatpush1.msra.mxu0 0.0
    %467 = vmatprep.subr.mxu0 0.0
    %468 = vmatpush1.msra.mxu0 0.0
    %469 = vmatprep.subr.mxu0 0.0
    %470 = vmatpush1.msra.mxu0 0.0
    %471 = vmatprep.subr.mxu0 0.0
    %472 = vmatpush1.msra.mxu0 0.0
    %473 = vmatprep.subr.mxu0 0.0
    %474 = vmatpush1.msra.mxu0 0.0
    %475 = vmatprep.subr.mxu0 0.0
    %476 = vmatpush1.msra.mxu0 0.0
    %477 = vmatprep.subr.mxu0 0.0
    %478 = vmatpush1.msra.mxu0 0.0
    %479 = vmatprep.subr.mxu0 0.0
    %480 = vmatpush1.msra.mxu0 0.0
    %481 = vmatprep.subr.mxu0 0.0
    %482 = vmatpush1.msra.mxu0 0.0
    %483 = vmatprep.subr.mxu0 0.0
    %484 = vmatpush1.msra.mxu0 0.0
    %485 = vmatprep.subr.mxu0 0.0
    %486 = vmatpush1.msra.mxu0 0.0
    %487 = vmatprep.subr.mxu0 0.0
    %488 = vmatpush1.msra.mxu0 0.0
    %489 = vmatprep.subr.mxu0 0.0
    %490 = vmatpush1.msra.mxu0 0.0
    %491 = vmatprep.subr.mxu0 0.0
    %492 = vmatpush1.msra.mxu0 0.0
    %493 = vmatprep.subr.mxu0 0.0
    %494 = vmatpush1.msra.mxu0 0.0
    %495 = vmatprep.subr.mxu0 0.0
    %496 = vmatpush1.msra.mxu0 0.0
    %497 = vmatprep.subr.mxu0 0.0
    %498 = vmatpush1.msra.mxu0 0.0
    %499 = vmatprep.subr.mxu0 0.0
    %500 = vmatpush1.msra.mxu0 0.0
    %501 = vmatprep.subr.mxu0 0.0
    %502 = vmatpush1.msra.mxu0 0.0
    %503 = vmatprep.mubr.f32.mxu0 0.0
    %504 = vmatmul.mubr.f32.gmra.mrb[0].mxu0 %v437
    %v505 = vpop.f32.mrb[0].mxu0
    %v506 = vadd.f32 0.0, %v505
    %v507 = vpop.f32.mrb[0].mxu0
    %508 = vdwg.mxu0
    %v509 = vrcp.pop %v435
    %v510 = vmul.f32 %v506, %v509
    %v511 = vld [vmem:[#allocation13] sm:$0xff]
    %512 = vrot.lane.b32.xlu0 %v195, 120
    %v513 = vpop.permute.xlu0 %512
    %514 = vrot.lane.b32.xlu0 %v268, 120
    %v515 = vpop.permute.xlu0 %514
    %v516 = vsel %vm349, %v513, 0
    %v518 = vsel %vm349, %v515, 0
    %520 = vmatprep.subr.mxu0 0.0
    %521 = vmatpush1.xpose.msra.mxu0 %v518
    %522 = vmatprep.subr.mxu0 0.0
    %523 = vmatpush1.xpose.msra.mxu0 0.0
    %524 = vmatprep.subr.mxu0 0.0
    %525 = vmatpush1.xpose.msra.mxu0 0.0
    %526 = vmatprep.subr.mxu0 0.0
    %527 = vmatpush1.xpose.msra.mxu0 0.0
    %528 = vmatprep.subr.mxu0 0.0
    %529 = vmatpush1.xpose.msra.mxu0 0.0
    %530 = vmatprep.subr.mxu0 0.0
    %531 = vmatpush1.xpose.msra.mxu0 0.0
    %532 = vmatprep.subr.mxu0 0.0
    %533 = vmatpush1.xpose.msra.mxu0 0.0
    %534 = vmatprep.subr.mxu0 0.0
    %535 = vmatpush1.xpose.msra.mxu0 0.0
    %536 = vmatprep.subr.mxu0 0.0
    %537 = vmatpush1.xpose.msra.mxu0 0.0
    %538 = vmatprep.subr.mxu0 0.0
    %539 = vmatpush1.xpose.msra.mxu0 0.0
    %540 = vmatprep.subr.mxu0 0.0
    %541 = vmatpush1.xpose.msra.mxu0 0.0
    %542 = vmatprep.subr.mxu0 0.0
    %543 = vmatpush1.xpose.msra.mxu0 0.0
    %544 = vmatprep.subr.mxu0 0.0
    %545 = vmatpush1.xpose.msra.mxu0 0.0
    %546 = vmatprep.subr.mxu0 0.0
    %547 = vmatpush1.xpose.msra.mxu0 0.0
    %548 = vmatprep.subr.mxu0 0.0
    %549 = vmatpush1.xpose.msra.mxu0 0.0
    %550 = vmatprep.subr.mxu0 0.0
    %551 = vmatpush1.xpose.msra.mxu0 0.0
    %552 = vmatprep.subr.mxu0 0.0
    %553 = vmatpush1.xpose.msra.mxu0 0.0
    %554 = vmatprep.subr.mxu0 0.0
    %555 = vmatpush1.xpose.msra.mxu0 0.0
    %556 = vmatprep.subr.mxu0 0.0
    %557 = vmatpush1.xpose.msra.mxu0 0.0
    %558 = vmatprep.subr.mxu0 0.0
    %559 = vmatpush1.xpose.msra.mxu0 0.0
    %560 = vmatprep.subr.mxu0 0.0
    %561 = vmatpush1.xpose.msra.mxu0 0.0
    %562 = vmatprep.subr.mxu0 0.0
    %563 = vmatpush1.xpose.msra.mxu0 0.0
    %564 = vmatprep.subr.mxu0 0.0
    %565 = vmatpush1.xpose.msra.mxu0 0.0
    %566 = vmatprep.subr.mxu0 0.0
    %567 = vmatpush1.xpose.msra.mxu0 0.0
    %568 = vmatprep.subr.mxu0 0.0
    %569 = vmatpush1.xpose.msra.mxu0 0.0
    %570 = vmatprep.subr.mxu0 0.0
    %571 = vmatpush1.xpose.msra.mxu0 0.0
    %572 = vmatprep.subr.mxu0 0.0
    %573 = vmatpush1.xpose.msra.mxu0 0.0
    %574 = vmatprep.subr.mxu0 0.0
    %575 = vmatpush1.xpose.msra.mxu0 0.0
    %576 = vmatprep.subr.mxu0 0.0
    %577 = vmatpush1.xpose.msra.mxu0 0.0
    %578 = vmatprep.subr.mxu0 0.0
    %579 = vmatpush1.xpose.msra.mxu0 0.0
    %580 = vmatprep.subr.mxu0 0.0
    %581 = vmatpush1.xpose.msra.mxu0 0.0
    %582 = vmatprep.subr.mxu0 0.0
    %583 = vmatpush1.xpose.msra.mxu0 0.0
    %584 = vmatprep.mubr.f32.mxu0 0.0
    %585 = vmatmul.mubr.f32.gmra.mrb[0].mxu0 %v516
    %v586 = vpop.f32.mrb[0].mxu0
    %v587 = vadd.f32 0.0, %v586
    %v588 = vpop.f32.mrb[0].mxu0
    %589 = vdwg.mxu0
    %v590 = vsel %vm348, %v587, -1000000.0
    %v591 = vsel %vm349, %v590, -inf
    %592 = vmax.xlane.f32.xlu0 %v591
    %v593 = vpop.xlane.xlu0 %592
    %v594 = vsub.f32 %v590, %v593
    %v595 = vmul.f32 %v594, 1.442695
    %v596 = vpow.pop %v595
    %v597 = vsel %vm349, %v596, 0.0
    %598 = vadd.xlane.f32.xlu0 %v597
    %v599 = vpop.xlane.xlu0 %598
    %601 = vrot.lane.b32.xlu0 %v343, 120
    %v602 = vpop.permute.xlu0 %601
    %v605 = vsel %vm349, %v596, 0
    %607 = vmatprep.subr.mxu0 0.0
    %608 = vmatpush1.msra.mxu0 %v602
    %609 = vmatprep.subr.mxu0 0.0
    %610 = vmatpush1.msra.mxu0 0.0
    %611 = vmatprep.subr.mxu0 0.0
    %612 = vmatpush1.msra.mxu0 0.0
    %613 = vmatprep.subr.mxu0 0.0
    %614 = vmatpush1.msra.mxu0 0.0
    %615 = vmatprep.subr.mxu0 0.0
    %616 = vmatpush1.msra.mxu0 0.0
    %617 = vmatprep.subr.mxu0 0.0
    %618 = vmatpush1.msra.mxu0 0.0
    %619 = vmatprep.subr.mxu0 0.0
    %620 = vmatpush1.msra.mxu0 0.0
    %621 = vmatprep.subr.mxu0 0.0
    %622 = vmatpush1.msra.mxu0 0.0
    %623 = vmatprep.subr.mxu0 0.0
    %624 = vmatpush1.msra.mxu0 0.0
    %625 = vmatprep.subr.mxu0 0.0
    %626 = vmatpush1.msra.mxu0 0.0
    %627 = vmatprep.subr.mxu0 0.0
    %628 = vmatpush1.msra.mxu0 0.0
    %629 = vmatprep.subr.mxu0 0.0
    %630 = vmatpush1.msra.mxu0 0.0
    %631 = vmatprep.subr.mxu0 0.0
    %632 = vmatpush1.msra.mxu0 0.0
    %633 = vmatprep.subr.mxu0 0.0
    %634 = vmatpush1.msra.mxu0 0.0
    %635 = vmatprep.subr.mxu0 0.0
    %636 = vmatpush1.msra.mxu0 0.0
    %637 = vmatprep.subr.mxu0 0.0
    %638 = vmatpush1.msra.mxu0 0.0
    %639 = vmatprep.subr.mxu0 0.0
    %640 = vmatpush1.msra.mxu0 0.0
    %641 = vmatprep.subr.mxu0 0.0
    %642 = vmatpush1.msra.mxu0 0.0
    %643 = vmatprep.subr.mxu0 0.0
    %644 = vmatpush1.msra.mxu0 0.0
    %645 = vmatprep.subr.mxu0 0.0
    %646 = vmatpush1.msra.mxu0 0.0
    %647 = vmatprep.subr.mxu0 0.0
    %648 = vmatpush1.msra.mxu0 0.0
    %649 = vmatprep.subr.mxu0 0.0
    %650 = vmatpush1.msra.mxu0 0.0
    %651 = vmatprep.subr.mxu0 0.0
    %652 = vmatpush1.msra.mxu0 0.0
    %653 = vmatprep.subr.mxu0 0.0
    %654 = vmatpush1.msra.mxu0 0.0
    %655 = vmatprep.subr.mxu0 0.0
    %656 = vmatpush1.msra.mxu0 0.0
    %657 = vmatprep.subr.mxu0 0.0
    %658 = vmatpush1.msra.mxu0 0.0
    %659 = vmatprep.subr.mxu0 0.0
    %660 = vmatpush1.msra.mxu0 0.0
    %661 = vmatprep.subr.mxu0 0.0
    %662 = vmatpush1.msra.mxu0 0.0
    %663 = vmatprep.subr.mxu0 0.0
    %664 = vmatpush1.msra.mxu0 0.0
    %665 = vmatprep.subr.mxu0 0.0
    %666 = vmatpush1.msra.mxu0 0.0
    %667 = vmatprep.subr.mxu0 0.0
    %668 = vmatpush1.msra.mxu0 0.0
    %669 = vmatprep.subr.mxu0 0.0
    %670 = vmatpush1.msra.mxu0 0.0
    %671 = vmatprep.mubr.f32.mxu0 0.0
    %672 = vmatmul.mubr.f32.gmra.mrb[0].mxu0 %v605
    %v673 = vpop.f32.mrb[0].mxu0
    %v674 = vadd.f32 0.0, %v673
    %v675 = vpop.f32.mrb[0].mxu0
    %676 = vdwg.mxu0
    %v677 = vrcp.pop %v599
    %v678 = vmul.f32 %v674, %v677
    %v679 = vld [vmem:[#allocation13 + $0x8] sm:$0xff]
    %v681 = vsel %vm349, %v678, 0
    %683 = vmatprep.subr.mxu0 0.0
    %684 = vmatpush1.msra.mxu0 %v679
    %685 = vmatprep.subr.mxu0 0.0
    %686 = vmatpush1.msra.mxu0 0.0
    %687 = vmatprep.subr.mxu0 0.0
    %688 = vmatpush1.msra.mxu0 0.0
    %689 = vmatprep.subr.mxu0 0.0
    %690 = vmatpush1.msra.mxu0 0.0
    %691 = vmatprep.subr.mxu0 0.0
    %692 = vmatpush1.msra.mxu0 0.0
    %693 = vmatprep.subr.mxu0 0.0
    %694 = vmatpush1.msra.mxu0 0.0
    %695 = vmatprep.subr.mxu0 0.0
    %696 = vmatpush1.msra.mxu0 0.0
    %697 = vmatprep.subr.mxu0 0.0
    %698 = vmatpush1.msra.mxu0 0.0
    %699 = vmatprep.subr.mxu0 0.0
    %700 = vmatpush1.msra.mxu0 0.0
    %701 = vmatprep.subr.mxu0 0.0
    %702 = vmatpush1.msra.mxu0 0.0
    %703 = vmatprep.subr.mxu0 0.0
    %704 = vmatpush1.msra.mxu0 0.0
    %705 = vmatprep.subr.mxu0 0.0
    %706 = vmatpush1.msra.mxu0 0.0
    %707 = vmatprep.subr.mxu0 0.0
    %708 = vmatpush1.msra.mxu0 0.0
    %709 = vmatprep.subr.mxu0 0.0
    %710 = vmatpush1.msra.mxu0 0.0
    %711 = vmatprep.subr.mxu0 0.0
    %712 = vmatpush1.msra.mxu0 0.0
    %713 = vmatprep.subr.mxu0 0.0
    %714 = vmatpush1.msra.mxu0 0.0
    %715 = vmatprep.subr.mxu0 0.0
    %716 = vmatpush1.msra.mxu0 0.0
    %717 = vmatprep.subr.mxu0 0.0
    %718 = vmatpush1.msra.mxu0 0.0
    %719 = vmatprep.subr.mxu0 0.0
    %720 = vmatpush1.msra.mxu0 0.0
    %721 = vmatprep.subr.mxu0 0.0
    %722 = vmatpush1.msra.mxu0 0.0
    %723 = vmatprep.subr.mxu0 0.0
    %724 = vmatpush1.msra.mxu0 0.0
    %725 = vmatprep.subr.mxu0 0.0
    %726 = vmatpush1.msra.mxu0 0.0
    %727 = vmatprep.subr.mxu0 0.0
    %728 = vmatpush1.msra.mxu0 0.0
    %729 = vmatprep.subr.mxu0 0.0
    %730 = vmatpush1.msra.mxu0 0.0
    %731 = vmatprep.subr.mxu0 0.0
    %732 = vmatpush1.msra.mxu0 0.0
    %733 = vmatprep.subr.mxu0 0.0
    %734 = vmatpush1.msra.mxu0 0.0
    %735 = vmatprep.subr.mxu0 0.0
    %736 = vmatpush1.msra.mxu0 0.0
    %737 = vmatprep.subr.mxu0 0.0
    %738 = vmatpush1.msra.mxu0 0.0
    %739 = vmatprep.subr.mxu0 0.0
    %740 = vmatpush1.msra.mxu0 0.0
    %741 = vmatprep.subr.mxu0 0.0
    %742 = vmatpush1.msra.mxu0 0.0
    %743 = vmatprep.subr.mxu0 0.0
    %744 = vmatpush1.msra.mxu0 0.0
    %745 = vmatprep.subr.mxu0 0.0
    %746 = vmatpush1.msra.mxu0 0.0
    %747 = vmatprep.mubr.f32.mxu0 0.0
    %748 = vmatmul.mubr.f32.gmra.mrb[0].mxu0 %v681
    %v749 = vpop.f32.mrb[0].mxu0
    %v750 = vadd.f32 0.0, %v749
    %v751 = vpop.f32.mrb[0].mxu0
    %752 = vdwg.mxu0
    %v754 = vsel %vm349, %v510, 0
    %756 = vmatprep.subr.mxu0 0.0
    %757 = vmatpush1.msra.mxu0 %v511
    %758 = vmatprep.subr.mxu0 0.0
    %759 = vmatpush1.msra.mxu0 0.0
    %760 = vmatprep.subr.mxu0 0.0
    %761 = vmatpush1.msra.mxu0 0.0
    %762 = vmatprep.subr.mxu0 0.0
    %763 = vmatpush1.msra.mxu0 0.0
    %764 = vmatprep.subr.mxu0 0.0
    %765 = vmatpush1.msra.mxu0 0.0
    %766 = vmatprep.subr.mxu0 0.0
    %767 = vmatpush1.msra.mxu0 0.0
    %768 = vmatprep.subr.mxu0 0.0
    %769 = vmatpush1.msra.mxu0 0.0
    %770 = vmatprep.subr.mxu0 0.0
    %771 = vmatpush1.msra.mxu0 0.0
    %772 = vmatprep.subr.mxu0 0.0
    %773 = vmatpush1.msra.mxu0 0.0
    %774 = vmatprep.subr.mxu0 0.0
    %775 = vmatpush1.msra.mxu0 0.0
    %776 = vmatprep.subr.mxu0 0.0
    %777 = vmatpush1.msra.mxu0 0.0
    %778 = vmatprep.subr.mxu0 0.0
    %779 = vmatpush1.msra.mxu0 0.0
    %780 = vmatprep.subr.mxu0 0.0
    %781 = vmatpush1.msra.mxu0 0.0
    %782 = vmatprep.subr.mxu0 0.0
    %783 = vmatpush1.msra.mxu0 0.0
    %784 = vmatprep.subr.mxu0 0.0
    %785 = vmatpush1.msra.mxu0 0.0
    %786 = vmatprep.subr.mxu0 0.0
    %787 = vmatpush1.msra.mxu0 0.0
    %788 = vmatprep.subr.mxu0 0.0
    %789 = vmatpush1.msra.mxu0 0.0
    %790 = vmatprep.subr.mxu0 0.0
    %791 = vmatpush1.msra.mxu0 0.0
    %792 = vmatprep.subr.mxu0 0.0
    %793 = vmatpush1.msra.mxu0 0.0
    %794 = vmatprep.subr.mxu0 0.0
    %795 = vmatpush1.msra.mxu0 0.0
    %796 = vmatprep.subr.mxu0 0.0
    %797 = vmatpush1.msra.mxu0 0.0
    %798 = vmatprep.subr.mxu0 0.0
    %799 = vmatpush1.msra.mxu0 0.0
    %800 = vmatprep.subr.mxu0 0.0
    %801 = vmatpush1.msra.mxu0 0.0
    %802 = vmatprep.subr.mxu0 0.0
    %803 = vmatpush1.msra.mxu0 0.0
    %804 = vmatprep.subr.mxu0 0.0
    %805 = vmatpush1.msra.mxu0 0.0
    %806 = vmatprep.subr.mxu0 0.0
    %807 = vmatpush1.msra.mxu0 0.0
    %808 = vmatprep.subr.mxu0 0.0
    %809 = vmatpush1.msra.mxu0 0.0
    %810 = vmatprep.subr.mxu0 0.0
    %811 = vmatpush1.msra.mxu0 0.0
    %812 = vmatprep.subr.mxu0 0.0
    %813 = vmatpush1.msra.mxu0 0.0
    %814 = vmatprep.subr.mxu0 0.0
    %815 = vmatpush1.msra.mxu0 0.0
    %816 = vmatprep.subr.mxu0 0.0
    %817 = vmatpush1.msra.mxu0 0.0
    %818 = vmatprep.subr.mxu0 0.0
    %819 = vmatpush1.msra.mxu0 0.0
    %820 = vmatprep.mubr.f32.mxu0 0.0
    %821 = vmatmul.mubr.f32.gmra.mrb[0].mxu0 %v754
    %v822 = vpop.f32.mrb[0].mxu0
    %v823 = vadd.f32 %v750, %v822
    %v824 = vpop.f32.mrb[0].mxu0
    %825 = vdwg.mxu0
    %826 = vrot.lane.b32.xlu0 %v195, 112
    %v827 = vpop.permute.xlu0 %826
    %828 = vrot.lane.b32.xlu0 %v268, 112
    %v829 = vpop.permute.xlu0 %828
    %v830 = vsel %vm349, %v827, 0
    %v832 = vsel %vm349, %v829, 0
    %834 = vmatprep.subr.mxu0 0.0
    %835 = vmatpush1.xpose.msra.mxu0 %v832
    %836 = vmatprep.subr.mxu0 0.0
    %837 = vmatpush1.xpose.msra.mxu0 0.0
    %838 = vmatprep.subr.mxu0 0.0
    %839 = vmatpush1.xpose.msra.mxu0 0.0
    %840 = vmatprep.subr.mxu0 0.0
    %841 = vmatpush1.xpose.msra.mxu0 0.0
    %842 = vmatprep.subr.mxu0 0.0
    %843 = vmatpush1.xpose.msra.mxu0 0.0
    %844 = vmatprep.subr.mxu0 0.0
    %845 = vmatpush1.xpose.msra.mxu0 0.0
    %846 = vmatprep.subr.mxu0 0.0
    %847 = vmatpush1.xpose.msra.mxu0 0.0
    %848 = vmatprep.subr.mxu0 0.0
    %849 = vmatpush1.xpose.msra.mxu0 0.0
    %850 = vmatprep.subr.mxu0 0.0
    %851 = vmatpush1.xpose.msra.mxu0 0.0
    %852 = vmatprep.subr.mxu0 0.0
    %853 = vmatpush1.xpose.msra.mxu0 0.0
    %854 = vmatprep.subr.mxu0 0.0
    %855 = vmatpush1.xpose.msra.mxu0 0.0
    %856 = vmatprep.subr.mxu0 0.0
    %857 = vmatpush1.xpose.msra.mxu0 0.0
    %858 = vmatprep.subr.mxu0 0.0
    %859 = vmatpush1.xpose.msra.mxu0 0.0
    %860 = vmatprep.subr.mxu0 0.0
    %861 = vmatpush1.xpose.msra.mxu0 0.0
    %862 = vmatprep.subr.mxu0 0.0
    %863 = vmatpush1.xpose.msra.mxu0 0.0
    %864 = vmatprep.subr.mxu0 0.0
    %865 = vmatpush1.xpose.msra.mxu0 0.0
    %866 = vmatprep.subr.mxu0 0.0
    %867 = vmatpush1.xpose.msra.mxu0 0.0
    %868 = vmatprep.subr.mxu0 0.0
    %869 = vmatpush1.xpose.msra.mxu0 0.0
    %870 = vmatprep.subr.mxu0 0.0
    %871 = vmatpush1.xpose.msra.mxu0 0.0
    %872 = vmatprep.subr.mxu0 0.0
    %873 = vmatpush1.xpose.msra.mxu0 0.0
    %874 = vmatprep.subr.mxu0 0.0
    %875 = vmatpush1.xpose.msra.mxu0 0.0
    %876 = vmatprep.subr.mxu0 0.0
    %877 = vmatpush1.xpose.msra.mxu0 0.0
    %878 = vmatprep.subr.mxu0 0.0
    %879 = vmatpush1.xpose.msra.mxu0 0.0
    %880 = vmatprep.subr.mxu0 0.0
    %881 = vmatpush1.xpose.msra.mxu0 0.0
    %882 = vmatprep.subr.mxu0 0.0
    %883 = vmatpush1.xpose.msra.mxu0 0.0
    %884 = vmatprep.subr.mxu0 0.0
    %885 = vmatpush1.xpose.msra.mxu0 0.0
    %886 = vmatprep.subr.mxu0 0.0
    %887 = vmatpush1.xpose.msra.mxu0 0.0
    %888 = vmatprep.subr.mxu0 0.0
    %889 = vmatpush1.xpose.msra.mxu0 0.0
    %890 = vmatprep.subr.mxu0 0.0
    %891 = vmatpush1.xpose.msra.mxu0 0.0
    %892 = vmatprep.subr.mxu0 0.0
    %893 = vmatpush1.xpose.msra.mxu0 0.0
    %894 = vmatprep.subr.mxu0 0.0
    %895 = vmatpush1.xpose.msra.mxu0 0.0
    %896 = vmatprep.subr.mxu0 0.0
    %897 = vmatpush1.xpose.msra.mxu0 0.0
    %898 = vmatprep.mubr.f32.mxu0 0.0
    %899 = vmatmul.mubr.f32.gmra.mrb[0].mxu0 %v830
    %v900 = vpop.f32.mrb[0].mxu0
    %v901 = vadd.f32 0.0, %v900
    %v902 = vpop.f32.mrb[0].mxu0
    %903 = vdwg.mxu0
    %v904 = vsel %vm348, %v901, -1000000.0
    %v905 = vsel %vm349, %v904, -inf
    %906 = vmax.xlane.f32.xlu0 %v905
    %v907 = vpop.xlane.xlu0 %906
    %v908 = vsub.f32 %v904, %v907
    %v909 = vmul.f32 %v908, 1.442695
    %v910 = vpow.pop %v909
    %v911 = vsel %vm349, %v910, 0.0
    %912 = vadd.xlane.f32.xlu0 %v911
    %v913 = vpop.xlane.xlu0 %912
    %914 = vrot.lane.b32.xlu0 %v343, 112
    %v915 = vpop.permute.xlu0 %914
    %v918 = vsel %vm349, %v910, 0
    %920 = vmatprep.subr.mxu0 0.0
    %921 = vmatpush1.msra.mxu0 %v915
    %922 = vmatprep.subr.mxu0 0.0
    %923 = vmatpush1.msra.mxu0 0.0
    %924 = vmatprep.subr.mxu0 0.0
    %925 = vmatpush1.msra.mxu0 0.0
    %926 = vmatprep.subr.mxu0 0.0
    %927 = vmatpush1.msra.mxu0 0.0
    %928 = vmatprep.subr.mxu0 0.0
    %929 = vmatpush1.msra.mxu0 0.0
    %930 = vmatprep.subr.mxu0 0.0
    %931 = vmatpush1.msra.mxu0 0.0
    %932 = vmatprep.subr.mxu0 0.0
    %933 = vmatpush1.msra.mxu0 0.0
    %934 = vmatprep.subr.mxu0 0.0
    %935 = vmatpush1.msra.mxu0 0.0
    %936 = vmatprep.subr.mxu0 0.0
    %937 = vmatpush1.msra.mxu0 0.0
    %938 = vmatprep.subr.mxu0 0.0
    %939 = vmatpush1.msra.mxu0 0.0
    %940 = vmatprep.subr.mxu0 0.0
    %941 = vmatpush1.msra.mxu0 0.0
    %942 = vmatprep.subr.mxu0 0.0
    %943 = vmatpush1.msra.mxu0 0.0
    %944 = vmatprep.subr.mxu0 0.0
    %945 = vmatpush1.msra.mxu0 0.0
    %946 = vmatprep.subr.mxu0 0.0
    %947 = vmatpush1.msra.mxu0 0.0
    %948 = vmatprep.subr.mxu0 0.0
    %949 = vmatpush1.msra.mxu0 0.0
    %950 = vmatprep.subr.mxu0 0.0
    %951 = vmatpush1.msra.mxu0 0.0
    %952 = vmatprep.subr.mxu0 0.0
    %953 = vmatpush1.msra.mxu0 0.0
    %954 = vmatprep.subr.mxu0 0.0
    %955 = vmatpush1.msra.mxu0 0.0
    %956 = vmatprep.subr.mxu0 0.0
    %957 = vmatpush1.msra.mxu0 0.0
    %958 = vmatprep.subr.mxu0 0.0
    %959 = vmatpush1.msra.mxu0 0.0
    %960 = vmatprep.subr.mxu0 0.0
    %961 = vmatpush1.msra.mxu0 0.0
    %962 = vmatprep.subr.mxu0 0.0
    %963 = vmatpush1.msra.mxu0 0.0
    %964 = vmatprep.subr.mxu0 0.0
    %965 = vmatpush1.msra.mxu0 0.0
    %966 = vmatprep.subr.mxu0 0.0
    %967 = vmatpush1.msra.mxu0 0.0
    %968 = vmatprep.subr.mxu0 0.0
    %969 = vmatpush1.msra.mxu0 0.0
    %970 = vmatprep.subr.mxu0 0.0
    %971 = vmatpush1.msra.mxu0 0.0
    %972 = vmatprep.subr.mxu0 0.0
    %973 = vmatpush1.msra.mxu0 0.0
    %974 = vmatprep.subr.mxu0 0.0
    %975 = vmatpush1.msra.mxu0 0.0
    %976 = vmatprep.subr.mxu0 0.0
    %977 = vmatpush1.msra.mxu0 0.0
    %978 = vmatprep.subr.mxu0 0.0
    %979 = vmatpush1.msra.mxu0 0.0
    %980 = vmatprep.subr.mxu0 0.0
    %981 = vmatpush1.msra.mxu0 0.0
    %982 = vmatprep.subr.mxu0 0.0
    %983 = vmatpush1.msra.mxu0 0.0
    %984 = vmatprep.mubr.f32.mxu0 0.0
    %985 = vmatmul.mubr.f32.gmra.mrb[0].mxu0 %v918
    %v986 = vpop.f32.mrb[0].mxu0
    %v987 = vadd.f32 0.0, %v986
    %v988 = vpop.f32.mrb[0].mxu0
    %989 = vdwg.mxu0
    %v990 = vrcp.pop %v913
    %v991 = vmul.f32 %v987, %v990
    %v992 = vld [vmem:[#allocation13 + $0x10] sm:$0xff]
    %v994 = vsel %vm349, %v991, 0
    %996 = vmatprep.subr.mxu0 0.0
    %997 = vmatpush1.msra.mxu0 %v992
    %998 = vmatprep.subr.mxu0 0.0
    %999 = vmatpush1.msra.mxu0 0.0
    %1000 = vmatprep.subr.mxu0 0.0
    %1001 = vmatpush1.msra.mxu0 0.0
    %1002 = vmatprep.subr.mxu0 0.0
    %1003 = vmatpush1.msra.mxu0 0.0
    %1004 = vmatprep.subr.mxu0 0.0
    %1005 = vmatpush1.msra.mxu0 0.0
    %1006 = vmatprep.subr.mxu0 0.0
    %1007 = vmatpush1.msra.mxu0 0.0
    %1008 = vmatprep.subr.mxu0 0.0
    %1009 = vmatpush1.msra.mxu0 0.0
    %1010 = vmatprep.subr.mxu0 0.0
    %1011 = vmatpush1.msra.mxu0 0.0
    %1012 = vmatprep.subr.mxu0 0.0
    %1013 = vmatpush1.msra.mxu0 0.0
    %1014 = vmatprep.subr.mxu0 0.0
    %1015 = vmatpush1.msra.mxu0 0.0
    %1016 = vmatprep.subr.mxu0 0.0
    %1017 = vmatpush1.msra.mxu0 0.0
    %1018 = vmatprep.subr.mxu0 0.0
    %1019 = vmatpush1.msra.mxu0 0.0
    %1020 = vmatprep.subr.mxu0 0.0
    %1021 = vmatpush1.msra.mxu0 0.0
    %1022 = vmatprep.subr.mxu0 0.0
    %1023 = vmatpush1.msra.mxu0 0.0
    %1024 = vmatprep.subr.mxu0 0.0
    %1025 = vmatpush1.msra.mxu0 0.0
    %1026 = vmatprep.subr.mxu0 0.0
    %1027 = vmatpush1.msra.mxu0 0.0
    %1028 = vmatprep.subr.mxu0 0.0
    %1029 = vmatpush1.msra.mxu0 0.0
    %1030 = vmatprep.subr.mxu0 0.0
    %1031 = vmatpush1.msra.mxu0 0.0
    %1032 = vmatprep.subr.mxu0 0.0
    %1033 = vmatpush1.msra.mxu0 0.0
    %1034 = vmatprep.subr.mxu0 0.0
    %1035 = vmatpush1.msra.mxu0 0.0
    %1036 = vmatprep.subr.mxu0 0.0
    %1037 = vmatpush1.msra.mxu0 0.0
    %1038 = vmatprep.subr.mxu0 0.0
    %1039 = vmatpush1.msra.mxu0 0.0
    %1040 = vmatprep.subr.mxu0 0.0
    %1041 = vmatpush1.msra.mxu0 0.0
    %1042 = vmatprep.subr.mxu0 0.0
    %1043 = vmatpush1.msra.mxu0 0.0
    %1044 = vmatprep.subr.mxu0 0.0
    %1045 = vmatpush1.msra.mxu0 0.0
    %1046 = vmatprep.subr.mxu0 0.0
    %1047 = vmatpush1.msra.mxu0 0.0
    %1048 = vmatprep.subr.mxu0 0.0
    %1049 = vmatpush1.msra.mxu0 0.0
    %1050 = vmatprep.subr.mxu0 0.0
    %1051 = vmatpush1.msra.mxu0 0.0
    %1052 = vmatprep.subr.mxu0 0.0
    %1053 = vmatpush1.msra.mxu0 0.0
    %1054 = vmatprep.subr.mxu0 0.0
    %1055 = vmatpush1.msra.mxu0 0.0
    %1056 = vmatprep.subr.mxu0 0.0
    %1057 = vmatpush1.msra.mxu0 0.0
    %1058 = vmatprep.subr.mxu0 0.0
    %1059 = vmatpush1.msra.mxu0 0.0
    %1060 = vmatprep.mubr.f32.mxu0 0.0
    %1061 = vmatmul.mubr.f32.gmra.mrb[0].mxu0 %v994
    %v1062 = vpop.f32.mrb[0].mxu0
    %v1063 = vadd.f32 0.0, %v1062
    %v1064 = vpop.f32.mrb[0].mxu0
    %1065 = vdwg.mxu0
    %v1066 = vadd.f32 %v823, %v1063
    %1067 = vrot.lane.b32.xlu0 %v195, 104
    %v1068 = vpop.permute.xlu0 %1067
    %1069 = vrot.lane.b32.xlu0 %v268, 104
    %v1070 = vpop.permute.xlu0 %1069
    %v1071 = vsel %vm349, %v1068, 0
    %v1073 = vsel %vm349, %v1070, 0
    %1075 = vmatprep.subr.mxu0 0.0
    %1076 = vmatpush1.xpose.msra.mxu0 %v1073
    %1077 = vmatprep.subr.mxu0 0.0
    %1078 = vmatpush1.xpose.msra.mxu0 0.0
    %1079 = vmatprep.subr.mxu0 0.0
    %1080 = vmatpush1.xpose.msra.mxu0 0.0
    %1081 = vmatprep.subr.mxu0 0.0
    %1082 = vmatpush1.xpose.msra.mxu0 0.0
    %1083 = vmatprep.subr.mxu0 0.0
    %1084 = vmatpush1.xpose.msra.mxu0 0.0
    %1085 = vmatprep.subr.mxu0 0.0
    %1086 = vmatpush1.xpose.msra.mxu0 0.0
    %1087 = vmatprep.subr.mxu0 0.0
    %1088 = vmatpush1.xpose.msra.mxu0 0.0
    %1089 = vmatprep.subr.mxu0 0.0
    %1090 = vmatpush1.xpose.msra.mxu0 0.0
    %1091 = vmatprep.subr.mxu0 0.0
    %1092 = vmatpush1.xpose.msra.mxu0 0.0
    %1093 = vmatprep.subr.mxu0 0.0
    %1094 = vmatpush1.xpose.msra.mxu0 0.0
    %1095 = vmatprep.subr.mxu0 0.0
    %1096 = vmatpush1.xpose.msra.mxu0 0.0
    %1097 = vmatprep.subr.mxu0 0.0
    %1098 = vmatpush1.xpose.msra.mxu0 0.0
    %1099 = vmatprep.subr.mxu0 0.0
    %1100 = vmatpush1.xpose.msra.mxu0 0.0
    %1101 = vmatprep.subr.mxu0 0.0
    %1102 = vmatpush1.xpose.msra.mxu0 0.0
    %1103 = vmatprep.subr.mxu0 0.0
    %1104 = vmatpush1.xpose.msra.mxu0 0.0
    %1105 = vmatprep.subr.mxu0 0.0
    %1106 = vmatpush1.xpose.msra.mxu0 0.0
    %1107 = vmatprep.subr.mxu0 0.0
    %1108 = vmatpush1.xpose.msra.mxu0 0.0
    %1109 = vmatprep.subr.mxu0 0.0
    %1110 = vmatpush1.xpose.msra.mxu0 0.0
    %1111 = vmatprep.subr.mxu0 0.0
    %1112 = vmatpush1.xpose.msra.mxu0 0.0
    %1113 = vmatprep.subr.mxu0 0.0
    %1114 = vmatpush1.xpose.msra.mxu0 0.0
    %1115 = vmatprep.subr.mxu0 0.0
    %1116 = vmatpush1.xpose.msra.mxu0 0.0
    %1117 = vmatprep.subr.mxu0 0.0
    %1118 = vmatpush1.xpose.msra.mxu0 0.0
    %1119 = vmatprep.subr.mxu0 0.0
    %1120 = vmatpush1.xpose.msra.mxu0 0.0
    %1121 = vmatprep.subr.mxu0 0.0
    %1122 = vmatpush1.xpose.msra.mxu0 0.0
    %1123 = vmatprep.subr.mxu0 0.0
    %1124 = vmatpush1.xpose.msra.mxu0 0.0
    %1125 = vmatprep.subr.mxu0 0.0
    %1126 = vmatpush1.xpose.msra.mxu0 0.0
    %1127 = vmatprep.subr.mxu0 0.0
    %1128 = vmatpush1.xpose.msra.mxu0 0.0
    %1129 = vmatprep.subr.mxu0 0.0
    %1130 = vmatpush1.xpose.msra.mxu0 0.0
    %1131 = vmatprep.subr.mxu0 0.0
    %1132 = vmatpush1.xpose.msra.mxu0 0.0
    %1133 = vmatprep.subr.mxu0 0.0
    %1134 = vmatpush1.xpose.msra.mxu0 0.0
    %1135 = vmatprep.subr.mxu0 0.0
    %1136 = vmatpush1.xpose.msra.mxu0 0.0
    %1137 = vmatprep.subr.mxu0 0.0
    %1138 = vmatpush1.xpose.msra.mxu0 0.0
    %1139 = vmatprep.mubr.f32.mxu0 0.0
    %1140 = vmatmul.mubr.f32.gmra.mrb[0].mxu0 %v1071
    %v1141 = vpop.f32.mrb[0].mxu0
    %v1142 = vadd.f32 0.0, %v1141
    %v1143 = vpop.f32.mrb[0].mxu0
    %1144 = vdwg.mxu0
    %v1145 = vsel %vm348, %v1142, -1000000.0
    %v1146 = vsel %vm349, %v1145, -inf
    %1147 = vmax.xlane.f32.xlu0 %v1146
    %v1148 = vpop.xlane.xlu0 %1147
    %v1149 = vsub.f32 %v1145, %v1148
    %v1150 = vmul.f32 %v1149, 1.442695
    %v1151 = vpow.pop %v1150
    %v1152 = vsel %vm349, %v1151, 0.0
    %1153 = vadd.xlane.f32.xlu0 %v1152
    %v1154 = vpop.xlane.xlu0 %1153
    %1155 = vrot.lane.b32.xlu0 %v343, 104
    %v1156 = vpop.permute.xlu0 %1155
    %v1159 = vsel %vm349, %v1151, 0
    %1161 = vmatprep.subr.mxu0 0.0
    %1162 = vmatpush1.msra.mxu0 %v1156
    %1163 = vmatprep.subr.mxu0 0.0
    %1164 = vmatpush1.msra.mxu0 0.0
    %1165 = vmatprep.subr.mxu0 0.0
    %1166 = vmatpush1.msra.mxu0 0.0
    %1167 = vmatprep.subr.mxu0 0.0
    %1168 = vmatpush1.msra.mxu0 0.0
    %1169 = vmatprep.subr.mxu0 0.0
    %1170 = vmatpush1.msra.mxu0 0.0
    %1171 = vmatprep.subr.mxu0 0.0
    %1172 = vmatpush1.msra.mxu0 0.0
    %1173 = vmatprep.subr.mxu0 0.0
    %1174 = vmatpush1.msra.mxu0 0.0
    %1175 = vmatprep.subr.mxu0 0.0
    %1176 = vmatpush1.msra.mxu0 0.0
    %1177 = vmatprep.subr.mxu0 0.0
    %1178 = vmatpush1.msra.mxu0 0.0
    %1179 = vmatprep.subr.mxu0 0.0
    %1180 = vmatpush1.msra.mxu0 0.0
    %1181 = vmatprep.subr.mxu0 0.0
    %1182 = vmatpush1.msra.mxu0 0.0
    %1183 = vmatprep.subr.mxu0 0.0
    %1184 = vmatpush1.msra.mxu0 0.0
    %1185 = vmatprep.subr.mxu0 0.0
    %1186 = vmatpush1.msra.mxu0 0.0
    %1187 = vmatprep.subr.mxu0 0.0
    %1188 = vmatpush1.msra.mxu0 0.0
    %1189 = vmatprep.subr.mxu0 0.0
    %1190 = vmatpush1.msra.mxu0 0.0
    %1191 = vmatprep.subr.mxu0 0.0
    %1192 = vmatpush1.msra.mxu0 0.0
    %1193 = vmatprep.subr.mxu0 0.0
    %1194 = vmatpush1.msra.mxu0 0.0
    %1195 = vmatprep.subr.mxu0 0.0
    %1196 = vmatpush1.msra.mxu0 0.0
    %1197 = vmatprep.subr.mxu0 0.0
    %1198 = vmatpush1.msra.mxu0 0.0
    %1199 = vmatprep.subr.mxu0 0.0
    %1200 = vmatpush1.msra.mxu0 0.0
    %1201 = vmatprep.subr.mxu0 0.0
    %1202 = vmatpush1.msra.mxu0 0.0
    %1203 = vmatprep.subr.mxu0 0.0
    %1204 = vmatpush1.msra.mxu0 0.0
    %1205 = vmatprep.subr.mxu0 0.0
    %1206 = vmatpush1.msra.mxu0 0.0
    %1207 = vmatprep.subr.mxu0 0.0
    %1208 = vmatpush1.msra.mxu0 0.0
    %1209 = vmatprep.subr.mxu0 0.0
    %1210 = vmatpush1.msra.mxu0 0.0
    %1211 = vmatprep.subr.mxu0 0.0
    %1212 = vmatpush1.msra.mxu0 0.0
    %1213 = vmatprep.subr.mxu0 0.0
    %1214 = vmatpush1.msra.mxu0 0.0
    %1215 = vmatprep.subr.mxu0 0.0
    %1216 = vmatpush1.msra.mxu0 0.0
    %1217 = vmatprep.subr.mxu0 0.0
    %1218 = vmatpush1.msra.mxu0 0.0
    %1219 = vmatprep.subr.mxu0 0.0
    %1220 = vmatpush1.msra.mxu0 0.0
    %1221 = vmatprep.subr.mxu0 0.0
    %1222 = vmatpush1.msra.mxu0 0.0
    %1223 = vmatprep.subr.mxu0 0.0
    %1224 = vmatpush1.msra.mxu0 0.0
    %1225 = vmatprep.mubr.f32.mxu0 0.0
    %1226 = vmatmul.mubr.f32.gmra.mrb[0].mxu0 %v1159
    %v1227 = vpop.f32.mrb[0].mxu0
    %v1228 = vadd.f32 0.0, %v1227
    %v1229 = vpop.f32.mrb[0].mxu0
    %1230 = vdwg.mxu0
    %v1231 = vrcp.pop %v1154
    %v1232 = vmul.f32 %v1228, %v1231
    %v1233 = vld [vmem:[#allocation13 + $0x18] sm:$0xff]
    %v1235 = vsel %vm349, %v1232, 0
    %1237 = vmatprep.subr.mxu0 0.0
    %1238 = vmatpush1.msra.mxu0 %v1233
    %1239 = vmatprep.subr.mxu0 0.0
    %1240 = vmatpush1.msra.mxu0 0.0
    %1241 = vmatprep.subr.mxu0 0.0
    %1242 = vmatpush1.msra.mxu0 0.0
    %1243 = vmatprep.subr.mxu0 0.0
    %1244 = vmatpush1.msra.mxu0 0.0
    %1245 = vmatprep.subr.mxu0 0.0
    %1246 = vmatpush1.msra.mxu0 0.0
    %1247 = vmatprep.subr.mxu0 0.0
    %1248 = vmatpush1.msra.mxu0 0.0
    %1249 = vmatprep.subr.mxu0 0.0
    %1250 = vmatpush1.msra.mxu0 0.0
    %1251 = vmatprep.subr.mxu0 0.0
    %1252 = vmatpush1.msra.mxu0 0.0
    %1253 = vmatprep.subr.mxu0 0.0
    %1254 = vmatpush1.msra.mxu0 0.0
    %1255 = vmatprep.subr.mxu0 0.0
    %1256 = vmatpush1.msra.mxu0 0.0
    %1257 = vmatprep.subr.mxu0 0.0
    %1258 = vmatpush1.msra.mxu0 0.0
    %1259 = vmatprep.subr.mxu0 0.0
    %1260 = vmatpush1.msra.mxu0 0.0
    %1261 = vmatprep.subr.mxu0 0.0
    %1262 = vmatpush1.msra.mxu0 0.0
    %1263 = vmatprep.subr.mxu0 0.0
    %1264 = vmatpush1.msra.mxu0 0.0
    %1265 = vmatprep.subr.mxu0 0.0
    %1266 = vmatpush1.msra.mxu0 0.0
    %1267 = vmatprep.subr.mxu0 0.0
    %1268 = vmatpush1.msra.mxu0 0.0
    %1269 = vmatprep.subr.mxu0 0.0
    %1270 = vmatpush1.msra.mxu0 0.0
    %1271 = vmatprep.subr.mxu0 0.0
    %1272 = vmatpush1.msra.mxu0 0.0
    %1273 = vmatprep.subr.mxu0 0.0
    %1274 = vmatpush1.msra.mxu0 0.0
    %1275 = vmatprep.subr.mxu0 0.0
    %1276 = vmatpush1.msra.mxu0 0.0
    %1277 = vmatprep.subr.mxu0 0.0
    %1278 = vmatpush1.msra.mxu0 0.0
    %1279 = vmatprep.subr.mxu0 0.0
    %1280 = vmatpush1.msra.mxu0 0.0
    %1281 = vmatprep.subr.mxu0 0.0
    %1282 = vmatpush1.msra.mxu0 0.0
    %1283 = vmatprep.subr.mxu0 0.0
    %1284 = vmatpush1.msra.mxu0 0.0
    %1285 = vmatprep.subr.mxu0 0.0
    %1286 = vmatpush1.msra.mxu0 0.0
    %1287 = vmatprep.subr.mxu0 0.0
    %1288 = vmatpush1.msra.mxu0 0.0
    %1289 = vmatprep.subr.mxu0 0.0
    %1290 = vmatpush1.msra.mxu0 0.0
    %1291 = vmatprep.subr.mxu0 0.0
    %1292 = vmatpush1.msra.mxu0 0.0
    %1293 = vmatprep.subr.mxu0 0.0
    %1294 = vmatpush1.msra.mxu0 0.0
    %1295 = vmatprep.subr.mxu0 0.0
    %1296 = vmatpush1.msra.mxu0 0.0
    %1297 = vmatprep.subr.mxu0 0.0
    %1298 = vmatpush1.msra.mxu0 0.0
    %1299 = vmatprep.subr.mxu0 0.0
    %1300 = vmatpush1.msra.mxu0 0.0
    %1301 = vmatprep.mubr.f32.mxu0 0.0
    %1302 = vmatmul.mubr.f32.gmra.mrb[0].mxu0 %v1235
    %v1303 = vpop.f32.mrb[0].mxu0
    %v1304 = vadd.f32 0.0, %v1303
    %v1305 = vpop.f32.mrb[0].mxu0
    %1306 = vdwg.mxu0
    %v1307 = vadd.f32 %v1066, %v1304
    %vm1308 = vcmask 261120
    %1309 = vst.msk [vmem:[#allocation15] sm:$0xff] %vm1308, %v1307
    %s1310 = scalar_lea.vmem [#allocation4], 8
    %v1311 = vld [vmem:[%s1310] sm:$0xff]
    %s1312 = scalar_lea.vmem [#allocation7], 8
    %v1313 = vld [vmem:[%s1312] sm:$0xff]
    %s1314 = scalar_lea.vmem [#allocation9], 8
    %v1315 = vld [vmem:[%s1314] sm:$0xff]
    %v1316 = vld [vmem:[#allocation10] sm:$0xff]
    %v1317 = vld [vmem:[#allocation10 + $0x8] sm:$0xff]
    %v1319 = vsel %vm121, %v1311, 0
    %1321 = vmatprep.subr.mxu0 0.0
    %1322 = vmatpush1.msra.mxu0 %v1316
    %1323 = vmatprep.subr.mxu0 0.0
    %1324 = vmatpush1.msra.mxu0 %v1317
    %1325 = vmatprep.subr.mxu0 0.0
    %1326 = vmatpush1.msra.mxu0 0.0
    %1327 = vmatprep.subr.mxu0 0.0
    %1328 = vmatpush1.msra.mxu0 0.0
    %1329 = vmatprep.subr.mxu0 0.0
    %1330 = vmatpush1.msra.mxu0 0.0
    %1331 = vmatprep.subr.mxu0 0.0
    %1332 = vmatpush1.msra.mxu0 0.0
    %1333 = vmatprep.subr.mxu0 0.0
    %1334 = vmatpush1.msra.mxu0 0.0
    %1335 = vmatprep.subr.mxu0 0.0
    %1336 = vmatpush1.msra.mxu0 0.0
    %1337 = vmatprep.subr.mxu0 0.0
    %1338 = vmatpush1.msra.mxu0 0.0
    %1339 = vmatprep.subr.mxu0 0.0
    %1340 = vmatpush1.msra.mxu0 0.0
    %1341 = vmatprep.subr.mxu0 0.0
    %1342 = vmatpush1.msra.mxu0 0.0
    %1343 = vmatprep.subr.mxu0 0.0
    %1344 = vmatpush1.msra.mxu0 0.0
    %1345 = vmatprep.subr.mxu0 0.0
    %1346 = vmatpush1.msra.mxu0 0.0
    %1347 = vmatprep.subr.mxu0 0.0
    %1348 = vmatpush1.msra.mxu0 0.0
    %1349 = vmatprep.subr.mxu0 0.0
    %1350 = vmatpush1.msra.mxu0 0.0
    %1351 = vmatprep.subr.mxu0 0.0
    %1352 = vmatpush1.msra.mxu0 0.0
    %1353 = vmatprep.subr.mxu0 0.0
    %1354 = vmatpush1.msra.mxu0 0.0
    %1355 = vmatprep.subr.mxu0 0.0
    %1356 = vmatpush1.msra.mxu0 0.0
    %1357 = vmatprep.subr.mxu0 0.0
    %1358 = vmatpush1.msra.mxu0 0.0
    %1359 = vmatprep.subr.mxu0 0.0
    %1360 = vmatpush1.msra.mxu0 0.0
    %1361 = vmatprep.subr.mxu0 0.0
    %1362 = vmatpush1.msra.mxu0 0.0
    %1363 = vmatprep.subr.mxu0 0.0
    %1364 = vmatpush1.msra.mxu0 0.0
    %1365 = vmatprep.subr.mxu0 0.0
    %1366 = vmatpush1.msra.mxu0 0.0
    %1367 = vmatprep.subr.mxu0 0.0
    %1368 = vmatpush1.msra.mxu0 0.0
    %1369 = vmatprep.subr.mxu0 0.0
    %1370 = vmatpush1.msra.mxu0 0.0
    %1371 = vmatprep.subr.mxu0 0.0
    %1372 = vmatpush1.msra.mxu0 0.0
    %1373 = vmatprep.subr.mxu0 0.0
    %1374 = vmatpush1.msra.mxu0 0.0
    %1375 = vmatprep.subr.mxu0 0.0
    %1376 = vmatpush1.msra.mxu0 0.0
    %1377 = vmatprep.subr.mxu0 0.0
    %1378 = vmatpush1.msra.mxu0 0.0
    %1379 = vmatprep.subr.mxu0 0.0
    %1380 = vmatpush1.msra.mxu0 0.0
    %1381 = vmatprep.subr.mxu0 0.0
    %1382 = vmatpush1.msra.mxu0 0.0
    %1383 = vmatprep.subr.mxu0 0.0
    %1384 = vmatpush1.msra.mxu0 0.0
    %1385 = vmatprep.mubr.f32.mxu0 0.0
    %1386 = vmatmul.mubr.f32.gmra.mrb[0].mxu0 %v1319
    %v1387 = vpop.f32.mrb[0].mxu0
    %v1388 = vadd.f32 0.0, %v1387
    %v1389 = vpop.f32.mrb[0].mxu0
    %1390 = vdwg.mxu0
    %v1391 = vmul.f32 %v1388, 0.35355338
    %v1392 = vld [vmem:[%s5] sm:$0xff]
    %v1393 = vld [vmem:[%s5 + $0x8] sm:$0xff]
    %v1395 = vsel %vm121, %v1313, 0
    %1397 = vmatprep.subr.mxu0 0.0
    %1398 = vmatpush1.msra.mxu0 %v1392
    %1399 = vmatprep.subr.mxu0 0.0
    %1400 = vmatpush1.msra.mxu0 %v1393
    %1401 = vmatprep.subr.mxu0 0.0
    %1402 = vmatpush1.msra.mxu0 0.0
    %1403 = vmatprep.subr.mxu0 0.0
    %1404 = vmatpush1.msra.mxu0 0.0
    %1405 = vmatprep.subr.mxu0 0.0
    %1406 = vmatpush1.msra.mxu0 0.0
    %1407 = vmatprep.subr.mxu0 0.0
    %1408 = vmatpush1.msra.mxu0 0.0
    %1409 = vmatprep.subr.mxu0 0.0
    %1410 = vmatpush1.msra.mxu0 0.0
    %1411 = vmatprep.subr.mxu0 0.0
    %1412 = vmatpush1.msra.mxu0 0.0
    %1413 = vmatprep.subr.mxu0 0.0
    %1414 = vmatpush1.msra.mxu0 0.0
    %1415 = vmatprep.subr.mxu0 0.0
    %1416 = vmatpush1.msra.mxu0 0.0
    %1417 = vmatprep.subr.mxu0 0.0
    %1418 = vmatpush1.msra.mxu0 0.0
    %1419 = vmatprep.subr.mxu0 0.0
    %1420 = vmatpush1.msra.mxu0 0.0
    %1421 = vmatprep.subr.mxu0 0.0
    %1422 = vmatpush1.msra.mxu0 0.0
    %1423 = vmatprep.subr.mxu0 0.0
    %1424 = vmatpush1.msra.mxu0 0.0
    %1425 = vmatprep.subr.mxu0 0.0
    %1426 = vmatpush1.msra.mxu0 0.0
    %1427 = vmatprep.subr.mxu0 0.0
    %1428 = vmatpush1.msra.mxu0 0.0
    %1429 = vmatprep.subr.mxu0 0.0
    %1430 = vmatpush1.msra.mxu0 0.0
    %1431 = vmatprep.subr.mxu0 0.0
    %1432 = vmatpush1.msra.mxu0 0.0
    %1433 = vmatprep.subr.mxu0 0.0
    %1434 = vmatpush1.msra.mxu0 0.0
    %1435 = vmatprep.subr.mxu0 0.0
    %1436 = vmatpush1.msra.mxu0 0.0
    %1437 = vmatprep.subr.mxu0 0.0
    %1438 = vmatpush1.msra.mxu0 0.0
    %1439 = vmatprep.subr.mxu0 0.0
    %1440 = vmatpush1.msra.mxu0 0.0
    %1441 = vmatprep.subr.mxu0 0.0
    %1442 = vmatpush1.msra.mxu0 0.0
    %1443 = vmatprep.subr.mxu0 0.0
    %1444 = vmatpush1.msra.mxu0 0.0
    %1445 = vmatprep.subr.mxu0 0.0
    %1446 = vmatpush1.msra.mxu0 0.0
    %1447 = vmatprep.subr.mxu0 0.0
    %1448 = vmatpush1.msra.mxu0 0.0
    %1449 = vmatprep.subr.mxu0 0.0
    %1450 = vmatpush1.msra.mxu0 0.0
    %1451 = vmatprep.subr.mxu0 0.0
    %1452 = vmatpush1.msra.mxu0 0.0
    %1453 = vmatprep.subr.mxu0 0.0
    %1454 = vmatpush1.msra.mxu0 0.0
    %1455 = vmatprep.subr.mxu0 0.0
    %1456 = vmatpush1.msra.mxu0 0.0
    %1457 = vmatprep.subr.mxu0 0.0
    %1458 = vmatpush1.msra.mxu0 0.0
    %1459 = vmatprep.subr.mxu0 0.0
    %1460 = vmatpush1.msra.mxu0 0.0
    %1461 = vmatprep.mubr.f32.mxu0 0.0
    %1462 = vmatmul.mubr.f32.gmra.mrb[0].mxu0 %v1395
    %v1463 = vpop.f32.mrb[0].mxu0
    %v1464 = vadd.f32 0.0, %v1463
    %v1465 = vpop.f32.mrb[0].mxu0
    %1466 = vdwg.mxu0
    %v1467 = vld [vmem:[#allocation12] sm:$0xff]
    %v1468 = vld [vmem:[#allocation12 + $0x8] sm:$0xff]
    %v1470 = vsel %vm121, %v1315, 0
    %1472 = vmatprep.subr.mxu0 0.0
    %1473 = vmatpush1.msra.mxu0 %v1467
    %1474 = vmatprep.subr.mxu0 0.0
    %1475 = vmatpush1.msra.mxu0 %v1468
    %1476 = vmatprep.subr.mxu0 0.0
    %1477 = vmatpush1.msra.mxu0 0.0
    %1478 = vmatprep.subr.mxu0 0.0
    %1479 = vmatpush1.msra.mxu0 0.0
    %1480 = vmatprep.subr.mxu0 0.0
    %1481 = vmatpush1.msra.mxu0 0.0
    %1482 = vmatprep.subr.mxu0 0.0
    %1483 = vmatpush1.msra.mxu0 0.0
    %1484 = vmatprep.subr.mxu0 0.0
    %1485 = vmatpush1.msra.mxu0 0.0
    %1486 = vmatprep.subr.mxu0 0.0
    %1487 = vmatpush1.msra.mxu0 0.0
    %1488 = vmatprep.subr.mxu0 0.0
    %1489 = vmatpush1.msra.mxu0 0.0
    %1490 = vmatprep.subr.mxu0 0.0
    %1491 = vmatpush1.msra.mxu0 0.0
    %1492 = vmatprep.subr.mxu0 0.0
    %1493 = vmatpush1.msra.mxu0 0.0
    %1494 = vmatprep.subr.mxu0 0.0
    %1495 = vmatpush1.msra.mxu0 0.0
    %1496 = vmatprep.subr.mxu0 0.0
    %1497 = vmatpush1.msra.mxu0 0.0
    %1498 = vmatprep.subr.mxu0 0.0
    %1499 = vmatpush1.msra.mxu0 0.0
    %1500 = vmatprep.subr.mxu0 0.0
    %1501 = vmatpush1.msra.mxu0 0.0
    %1502 = vmatprep.subr.mxu0 0.0
    %1503 = vmatpush1.msra.mxu0 0.0
    %1504 = vmatprep.subr.mxu0 0.0
    %1505 = vmatpush1.msra.mxu0 0.0
    %1506 = vmatprep.subr.mxu0 0.0
    %1507 = vmatpush1.msra.mxu0 0.0
    %1508 = vmatprep.subr.mxu0 0.0
    %1509 = vmatpush1.msra.mxu0 0.0
    %1510 = vmatprep.subr.mxu0 0.0
    %1511 = vmatpush1.msra.mxu0 0.0
    %1512 = vmatprep.subr.mxu0 0.0
    %1513 = vmatpush1.msra.mxu0 0.0
    %1514 = vmatprep.subr.mxu0 0.0
    %1515 = vmatpush1.msra.mxu0 0.0
    %1516 = vmatprep.subr.mxu0 0.0
    %1517 = vmatpush1.msra.mxu0 0.0
    %1518 = vmatprep.subr.mxu0 0.0
    %1519 = vmatpush1.msra.mxu0 0.0
    %1520 = vmatprep.subr.mxu0 0.0
    %1521 = vmatpush1.msra.mxu0 0.0
    %1522 = vmatprep.subr.mxu0 0.0
    %1523 = vmatpush1.msra.mxu0 0.0
    %1524 = vmatprep.subr.mxu0 0.0
    %1525 = vmatpush1.msra.mxu0 0.0
    %1526 = vmatprep.subr.mxu0 0.0
    %1527 = vmatpush1.msra.mxu0 0.0
    %1528 = vmatprep.subr.mxu0 0.0
    %1529 = vmatpush1.msra.mxu0 0.0
    %1530 = vmatprep.subr.mxu0 0.0
    %1531 = vmatpush1.msra.mxu0 0.0
    %1532 = vmatprep.subr.mxu0 0.0
    %1533 = vmatpush1.msra.mxu0 0.0
    %1534 = vmatprep.subr.mxu0 0.0
    %1535 = vmatpush1.msra.mxu0 0.0
    %1536 = vmatprep.mubr.f32.mxu0 0.0
    %1537 = vmatmul.mubr.f32.gmra.mrb[0].mxu0 %v1470
    %v1538 = vpop.f32.mrb[0].mxu0
    %v1539 = vadd.f32 0.0, %v1538
    %v1540 = vpop.f32.mrb[0].mxu0
    %1541 = vdwg.mxu0
    %s1542 = sld [smem:[#allocation3 + $0x1]]
    %v1543 = vstv %s1542
    %vm1544 = vcmp.lt.s32.totalorder %v115, %v1543
    %v1546 = vsel %vm349, %v1391, 0
    %v1549 = vsel %vm349, %v1464, 0
    %1551 = vmatprep.subr.mxu0 0.0
    %1552 = vmatpush1.xpose.msra.mxu0 %v1549
    %1553 = vmatprep.subr.mxu0 0.0
    %1554 = vmatpush1.xpose.msra.mxu0 0.0
    %1555 = vmatprep.subr.mxu0 0.0
    %1556 = vmatpush1.xpose.msra.mxu0 0.0
    %1557 = vmatprep.subr.mxu0 0.0
    %1558 = vmatpush1.xpose.msra.mxu0 0.0
    %1559 = vmatprep.subr.mxu0 0.0
    %1560 = vmatpush1.xpose.msra.mxu0 0.0
    %1561 = vmatprep.subr.mxu0 0.0
    %1562 = vmatpush1.xpose.msra.mxu0 0.0
    %1563 = vmatprep.subr.mxu0 0.0
    %1564 = vmatpush1.xpose.msra.mxu0 0.0
    %1565 = vmatprep.subr.mxu0 0.0
    %1566 = vmatpush1.xpose.msra.mxu0 0.0
    %1567 = vmatprep.subr.mxu0 0.0
    %1568 = vmatpush1.xpose.msra.mxu0 0.0
    %1569 = vmatprep.subr.mxu0 0.0
    %1570 = vmatpush1.xpose.msra.mxu0 0.0
    %1571 = vmatprep.subr.mxu0 0.0
    %1572 = vmatpush1.xpose.msra.mxu0 0.0
    %1573 = vmatprep.subr.mxu0 0.0
    %1574 = vmatpush1.xpose.msra.mxu0 0.0
    %1575 = vmatprep.subr.mxu0 0.0
    %1576 = vmatpush1.xpose.msra.mxu0 0.0
    %1577 = vmatprep.subr.mxu0 0.0
    %1578 = vmatpush1.xpose.msra.mxu0 0.0
    %1579 = vmatprep.subr.mxu0 0.0
    %1580 = vmatpush1.xpose.msra.mxu0 0.0
    %1581 = vmatprep.subr.mxu0 0.0
    %1582 = vmatpush1.xpose.msra.mxu0 0.0
    %1583 = vmatprep.subr.mxu0 0.0
    %1584 = vmatpush1.xpose.msra.mxu0 0.0
    %1585 = vmatprep.subr.mxu0 0.0
    %1586 = vmatpush1.xpose.msra.mxu0 0.0
    %1587 = vmatprep.subr.mxu0 0.0
    %1588 = vmatpush1.xpose.msra.mxu0 0.0
    %1589 = vmatprep.subr.mxu0 0.0
    %1590 = vmatpush1.xpose.msra.mxu0 0.0
    %1591 = vmatprep.subr.mxu0 0.0
    %1592 = vmatpush1.xpose.msra.mxu0 0.0
    %1593 = vmatprep.subr.mxu0 0.0
    %1594 = vmatpush1.xpose.msra.mxu0 0.0
    %1595 = vmatprep.subr.mxu0 0.0
    %1596 = vmatpush1.xpose.msra.mxu0 0.0
    %1597 = vmatprep.subr.mxu0 0.0
    %1598 = vmatpush1.xpose.msra.mxu0 0.0
    %1599 = vmatprep.subr.mxu0 0.0
    %1600 = vmatpush1.xpose.msra.mxu0 0.0
    %1601 = vmatprep.subr.mxu0 0.0
    %1602 = vmatpush1.xpose.msra.mxu0 0.0
    %1603 = vmatprep.subr.mxu0 0.0
    %1604 = vmatpush1.xpose.msra.mxu0 0.0
    %1605 = vmatprep.subr.mxu0 0.0
    %1606 = vmatpush1.xpose.msra.mxu0 0.0
    %1607 = vmatprep.subr.mxu0 0.0
    %1608 = vmatpush1.xpose.msra.mxu0 0.0
    %1609 = vmatprep.subr.mxu0 0.0
    %1610 = vmatpush1.xpose.msra.mxu0 0.0
    %1611 = vmatprep.subr.mxu0 0.0
    %1612 = vmatpush1.xpose.msra.mxu0 0.0
    %1613 = vmatprep.subr.mxu0 0.0
    %1614 = vmatpush1.xpose.msra.mxu0 0.0
    %1615 = vmatprep.mubr.f32.mxu0 0.0
    %1616 = vmatmul.mubr.f32.gmra.mrb[0].mxu0 %v1546
    %v1617 = vpop.f32.mrb[0].mxu0
    %v1618 = vadd.f32 0.0, %v1617
    %v1619 = vpop.f32.mrb[0].mxu0
    %1620 = vdwg.mxu0
    %v1621 = vsel %vm1544, %v1618, -1000000.0
    %v1622 = vsel %vm349, %v1621, -inf
    %1623 = vmax.xlane.f32.xlu0 %v1622
    %v1624 = vpop.xlane.xlu0 %1623
    %v1625 = vsub.f32 %v1621, %v1624
    %v1626 = vmul.f32 %v1625, 1.442695
    %v1627 = vpow.pop %v1626
    %v1628 = vsel %vm349, %v1627, 0.0
    %1629 = vadd.xlane.f32.xlu0 %v1628
    %v1630 = vpop.xlane.xlu0 %1629
    %v1632 = vsel %vm349, %v1627, 0
    %1634 = vmatprep.subr.mxu0 0.0
    %1635 = vmatpush1.msra.mxu0 %v1539
    %1636 = vmatprep.subr.mxu0 0.0
    %1637 = vmatpush1.msra.mxu0 0.0
    %1638 = vmatprep.subr.mxu0 0.0
    %1639 = vmatpush1.msra.mxu0 0.0
    %1640 = vmatprep.subr.mxu0 0.0
    %1641 = vmatpush1.msra.mxu0 0.0
    %1642 = vmatprep.subr.mxu0 0.0
    %1643 = vmatpush1.msra.mxu0 0.0
    %1644 = vmatprep.subr.mxu0 0.0
    %1645 = vmatpush1.msra.mxu0 0.0
    %1646 = vmatprep.subr.mxu0 0.0
    %1647 = vmatpush1.msra.mxu0 0.0
    %1648 = vmatprep.subr.mxu0 0.0
    %1649 = vmatpush1.msra.mxu0 0.0
    %1650 = vmatprep.subr.mxu0 0.0
    %1651 = vmatpush1.msra.mxu0 0.0
    %1652 = vmatprep.subr.mxu0 0.0
    %1653 = vmatpush1.msra.mxu0 0.0
    %1654 = vmatprep.subr.mxu0 0.0
    %1655 = vmatpush1.msra.mxu0 0.0
    %1656 = vmatprep.subr.mxu0 0.0
    %1657 = vmatpush1.msra.mxu0 0.0
    %1658 = vmatprep.subr.mxu0 0.0
    %1659 = vmatpush1.msra.mxu0 0.0
    %1660 = vmatprep.subr.mxu0 0.0
    %1661 = vmatpush1.msra.mxu0 0.0
    %1662 = vmatprep.subr.mxu0 0.0
    %1663 = vmatpush1.msra.mxu0 0.0
    %1664 = vmatprep.subr.mxu0 0.0
    %1665 = vmatpush1.msra.mxu0 0.0
    %1666 = vmatprep.subr.mxu0 0.0
    %1667 = vmatpush1.msra.mxu0 0.0
    %1668 = vmatprep.subr.mxu0 0.0
    %1669 = vmatpush1.msra.mxu0 0.0
    %1670 = vmatprep.subr.mxu0 0.0
    %1671 = vmatpush1.msra.mxu0 0.0
    %1672 = vmatprep.subr.mxu0 0.0
    %1673 = vmatpush1.msra.mxu0 0.0
    %1674 = vmatprep.subr.mxu0 0.0
    %1675 = vmatpush1.msra.mxu0 0.0
    %1676 = vmatprep.subr.mxu0 0.0
    %1677 = vmatpush1.msra.mxu0 0.0
    %1678 = vmatprep.subr.mxu0 0.0
    %1679 = vmatpush1.msra.mxu0 0.0
    %1680 = vmatprep.subr.mxu0 0.0
    %1681 = vmatpush1.msra.mxu0 0.0
    %1682 = vmatprep.subr.mxu0 0.0
    %1683 = vmatpush1.msra.mxu0 0.0
    %1684 = vmatprep.subr.mxu0 0.0
    %1685 = vmatpush1.msra.mxu0 0.0
    %1686 = vmatprep.subr.mxu0 0.0
    %1687 = vmatpush1.msra.mxu0 0.0
    %1688 = vmatprep.subr.mxu0 0.0
    %1689 = vmatpush1.msra.mxu0 0.0
    %1690 = vmatprep.subr.mxu0 0.0
    %1691 = vmatpush1.msra.mxu0 0.0
    %1692 = vmatprep.subr.mxu0 0.0
    %1693 = vmatpush1.msra.mxu0 0.0
    %1694 = vmatprep.subr.mxu0 0.0
    %1695 = vmatpush1.msra.mxu0 0.0
    %1696 = vmatprep.subr.mxu0 0.0
    %1697 = vmatpush1.msra.mxu0 0.0
    %1698 = vmatprep.mubr.f32.mxu0 0.0
    %1699 = vmatmul.mubr.f32.gmra.mrb[0].mxu0 %v1632
    %v1700 = vpop.f32.mrb[0].mxu0
    %v1701 = vadd.f32 0.0, %v1700
    %v1702 = vpop.f32.mrb[0].mxu0
    %1703 = vdwg.mxu0
    %v1704 = vrcp.pop %v1630
    %v1705 = vmul.f32 %v1701, %v1704
    %v1706 = vld [vmem:[#allocation13] sm:$0xff]
    %1707 = vrot.lane.b32.xlu0 %v1391, 120
    %v1708 = vpop.permute.xlu0 %1707
    %1709 = vrot.lane.b32.xlu0 %v1464, 120
    %v1710 = vpop.permute.xlu0 %1709
    %v1711 = vsel %vm349, %v1708, 0
    %v1713 = vsel %vm349, %v1710, 0
    %1715 = vmatprep.subr.mxu0 0.0
    %1716 = vmatpush1.xpose.msra.mxu0 %v1713
    %1717 = vmatprep.subr.mxu0 0.0
    %1718 = vmatpush1.xpose.msra.mxu0 0.0
    %1719 = vmatprep.subr.mxu0 0.0
    %1720 = vmatpush1.xpose.msra.mxu0 0.0
    %1721 = vmatprep.subr.mxu0 0.0
    %1722 = vmatpush1.xpose.msra.mxu0 0.0
    %1723 = vmatprep.subr.mxu0 0.0
    %1724 = vmatpush1.xpose.msra.mxu0 0.0
    %1725 = vmatprep.subr.mxu0 0.0
    %1726 = vmatpush1.xpose.msra.mxu0 0.0
    %1727 = vmatprep.subr.mxu0 0.0
    %1728 = vmatpush1.xpose.msra.mxu0 0.0
    %1729 = vmatprep.subr.mxu0 0.0
    %1730 = vmatpush1.xpose.msra.mxu0 0.0
    %1731 = vmatprep.subr.mxu0 0.0
    %1732 = vmatpush1.xpose.msra.mxu0 0.0
    %1733 = vmatprep.subr.mxu0 0.0
    %1734 = vmatpush1.xpose.msra.mxu0 0.0
    %1735 = vmatprep.subr.mxu0 0.0
    %1736 = vmatpush1.xpose.msra.mxu0 0.0
    %1737 = vmatprep.subr.mxu0 0.0
    %1738 = vmatpush1.xpose.msra.mxu0 0.0
    %1739 = vmatprep.subr.mxu0 0.0
    %1740 = vmatpush1.xpose.msra.mxu0 0.0
    %1741 = vmatprep.subr.mxu0 0.0
    %1742 = vmatpush1.xpose.msra.mxu0 0.0
    %1743 = vmatprep.subr.mxu0 0.0
    %1744 = vmatpush1.xpose.msra.mxu0 0.0
    %1745 = vmatprep.subr.mxu0 0.0
    %1746 = vmatpush1.xpose.msra.mxu0 0.0
    %1747 = vmatprep.subr.mxu0 0.0
    %1748 = vmatpush1.xpose.msra.mxu0 0.0
    %1749 = vmatprep.subr.mxu0 0.0
    %1750 = vmatpush1.xpose.msra.mxu0 0.0
    %1751 = vmatprep.subr.mxu0 0.0
    %1752 = vmatpush1.xpose.msra.mxu0 0.0
    %1753 = vmatprep.subr.mxu0 0.0
    %1754 = vmatpush1.xpose.msra.mxu0 0.0
    %1755 = vmatprep.subr.mxu0 0.0
    %1756 = vmatpush1.xpose.msra.mxu0 0.0
    %1757 = vmatprep.subr.mxu0 0.0
    %1758 = vmatpush1.xpose.msra.mxu0 0.0
    %1759 = vmatprep.subr.mxu0 0.0
    %1760 = vmatpush1.xpose.msra.mxu0 0.0
    %1761 = vmatprep.subr.mxu0 0.0
    %1762 = vmatpush1.xpose.msra.mxu0 0.0
    %1763 = vmatprep.subr.mxu0 0.0
    %1764 = vmatpush1.xpose.msra.mxu0 0.0
    %1765 = vmatprep.subr.mxu0 0.0
    %1766 = vmatpush1.xpose.msra.mxu0 0.0
    %1767 = vmatprep.subr.mxu0 0.0
    %1768 = vmatpush1.xpose.msra.mxu0 0.0
    %1769 = vmatprep.subr.mxu0 0.0
    %1770 = vmatpush1.xpose.msra.mxu0 0.0
    %1771 = vmatprep.subr.mxu0 0.0
    %1772 = vmatpush1.xpose.msra.mxu0 0.0
    %1773 = vmatprep.subr.mxu0 0.0
    %1774 = vmatpush1.xpose.msra.mxu0 0.0
    %1775 = vmatprep.subr.mxu0 0.0
    %1776 = vmatpush1.xpose.msra.mxu0 0.0
    %1777 = vmatprep.subr.mxu0 0.0
    %1778 = vmatpush1.xpose.msra.mxu0 0.0
    %1779 = vmatprep.mubr.f32.mxu0 0.0
    %1780 = vmatmul.mubr.f32.gmra.mrb[0].mxu0 %v1711
    %v1781 = vpop.f32.mrb[0].mxu0
    %v1782 = vadd.f32 0.0, %v1781
    %v1783 = vpop.f32.mrb[0].mxu0
    %1784 = vdwg.mxu0
    %v1785 = vsel %vm1544, %v1782, -1000000.0
    %v1786 = vsel %vm349, %v1785, -inf
    %1787 = vmax.xlane.f32.xlu0 %v1786
    %v1788 = vpop.xlane.xlu0 %1787
    %v1789 = vsub.f32 %v1785, %v1788
    %v1790 = vmul.f32 %v1789, 1.442695
    %v1791 = vpow.pop %v1790
    %v1792 = vsel %vm349, %v1791, 0.0
    %1793 = vadd.xlane.f32.xlu0 %v1792
    %v1794 = vpop.xlane.xlu0 %1793
    %1796 = vrot.lane.b32.xlu0 %v1539, 120
    %v1797 = vpop.permute.xlu0 %1796
    %v1800 = vsel %vm349, %v1791, 0
    %1802 = vmatprep.subr.mxu0 0.0
    %1803 = vmatpush1.msra.mxu0 %v1797
    %1804 = vmatprep.subr.mxu0 0.0
    %1805 = vmatpush1.msra.mxu0 0.0
    %1806 = vmatprep.subr.mxu0 0.0
    %1807 = vmatpush1.msra.mxu0 0.0
    %1808 = vmatprep.subr.mxu0 0.0
    %1809 = vmatpush1.msra.mxu0 0.0
    %1810 = vmatprep.subr.mxu0 0.0
    %1811 = vmatpush1.msra.mxu0 0.0
    %1812 = vmatprep.subr.mxu0 0.0
    %1813 = vmatpush1.msra.mxu0 0.0
    %1814 = vmatprep.subr.mxu0 0.0
    %1815 = vmatpush1.msra.mxu0 0.0
    %1816 = vmatprep.subr.mxu0 0.0
    %1817 = vmatpush1.msra.mxu0 0.0
    %1818 = vmatprep.subr.mxu0 0.0
    %1819 = vmatpush1.msra.mxu0 0.0
    %1820 = vmatprep.subr.mxu0 0.0
    %1821 = vmatpush1.msra.mxu0 0.0
    %1822 = vmatprep.subr.mxu0 0.0
    %1823 = vmatpush1.msra.mxu0 0.0
    %1824 = vmatprep.subr.mxu0 0.0
    %1825 = vmatpush1.msra.mxu0 0.0
    %1826 = vmatprep.subr.mxu0 0.0
    %1827 = vmatpush1.msra.mxu0 0.0
    %1828 = vmatprep.subr.mxu0 0.0
    %1829 = vmatpush1.msra.mxu0 0.0
    %1830 = vmatprep.subr.mxu0 0.0
    %1831 = vmatpush1.msra.mxu0 0.0
    %1832 = vmatprep.subr.mxu0 0.0
    %1833 = vmatpush1.msra.mxu0 0.0
    %1834 = vmatprep.subr.mxu0 0.0
    %1835 = vmatpush1.msra.mxu0 0.0
    %1836 = vmatprep.subr.mxu0 0.0
    %1837 = vmatpush1.msra.mxu0 0.0
    %1838 = vmatprep.subr.mxu0 0.0
    %1839 = vmatpush1.msra.mxu0 0.0
    %1840 = vmatprep.subr.mxu0 0.0
    %1841 = vmatpush1.msra.mxu0 0.0
    %1842 = vmatprep.subr.mxu0 0.0
    %1843 = vmatpush1.msra.mxu0 0.0
    %1844 = vmatprep.subr.mxu0 0.0
    %1845 = vmatpush1.msra.mxu0 0.0
    %1846 = vmatprep.subr.mxu0 0.0
    %1847 = vmatpush1.msra.mxu0 0.0
    %1848 = vmatprep.subr.mxu0 0.0
    %1849 = vmatpush1.msra.mxu0 0.0
    %1850 = vmatprep.subr.mxu0 0.0
    %1851 = vmatpush1.msra.mxu0 0.0
    %1852 = vmatprep.subr.mxu0 0.0
    %1853 = vmatpush1.msra.mxu0 0.0
    %1854 = vmatprep.subr.mxu0 0.0
    %1855 = vmatpush1.msra.mxu0 0.0
    %1856 = vmatprep.subr.mxu0 0.0
    %1857 = vmatpush1.msra.mxu0 0.0
    %1858 = vmatprep.subr.mxu0 0.0
    %1859 = vmatpush1.msra.mxu0 0.0
    %1860 = vmatprep.subr.mxu0 0.0
    %1861 = vmatpush1.msra.mxu0 0.0
    %1862 = vmatprep.subr.mxu0 0.0
    %1863 = vmatpush1.msra.mxu0 0.0
    %1864 = vmatprep.subr.mxu0 0.0
    %1865 = vmatpush1.msra.mxu0 0.0
    %1866 = vmatprep.mubr.f32.mxu0 0.0
    %1867 = vmatmul.mubr.f32.gmra.mrb[0].mxu0 %v1800
    %v1868 = vpop.f32.mrb[0].mxu0
    %v1869 = vadd.f32 0.0, %v1868
    %v1870 = vpop.f32.mrb[0].mxu0
    %1871 = vdwg.mxu0
    %v1872 = vrcp.pop %v1794
    %v1873 = vmul.f32 %v1869, %v1872
    %v1874 = vld [vmem:[#allocation13 + $0x8] sm:$0xff]
    %v1876 = vsel %vm349, %v1873, 0
    %1878 = vmatprep.subr.mxu0 0.0
    %1879 = vmatpush1.msra.mxu0 %v1874
    %1880 = vmatprep.subr.mxu0 0.0
    %1881 = vmatpush1.msra.mxu0 0.0
    %1882 = vmatprep.subr.mxu0 0.0
    %1883 = vmatpush1.msra.mxu0 0.0
    %1884 = vmatprep.subr.mxu0 0.0
    %1885 = vmatpush1.msra.mxu0 0.0
    %1886 = vmatprep.subr.mxu0 0.0
    %1887 = vmatpush1.msra.mxu0 0.0
    %1888 = vmatprep.subr.mxu0 0.0
    %1889 = vmatpush1.msra.mxu0 0.0
    %1890 = vmatprep.subr.mxu0 0.0
    %1891 = vmatpush1.msra.mxu0 0.0
    %1892 = vmatprep.subr.mxu0 0.0
    %1893 = vmatpush1.msra.mxu0 0.0
    %1894 = vmatprep.subr.mxu0 0.0
    %1895 = vmatpush1.msra.mxu0 0.0
    %1896 = vmatprep.subr.mxu0 0.0
    %1897 = vmatpush1.msra.mxu0 0.0
    %1898 = vmatprep.subr.mxu0 0.0
    %1899 = vmatpush1.msra.mxu0 0.0
    %1900 = vmatprep.subr.mxu0 0.0
    %1901 = vmatpush1.msra.mxu0 0.0
    %1902 = vmatprep.subr.mxu0 0.0
    %1903 = vmatpush1.msra.mxu0 0.0
    %1904 = vmatprep.subr.mxu0 0.0
    %1905 = vmatpush1.msra.mxu0 0.0
    %1906 = vmatprep.subr.mxu0 0.0
    %1907 = vmatpush1.msra.mxu0 0.0
    %1908 = vmatprep.subr.mxu0 0.0
    %1909 = vmatpush1.msra.mxu0 0.0
    %1910 = vmatprep.subr.mxu0 0.0
    %1911 = vmatpush1.msra.mxu0 0.0
    %1912 = vmatprep.subr.mxu0 0.0
    %1913 = vmatpush1.msra.mxu0 0.0
    %1914 = vmatprep.subr.mxu0 0.0
    %1915 = vmatpush1.msra.mxu0 0.0
    %1916 = vmatprep.subr.mxu0 0.0
    %1917 = vmatpush1.msra.mxu0 0.0
    %1918 = vmatprep.subr.mxu0 0.0
    %1919 = vmatpush1.msra.mxu0 0.0
    %1920 = vmatprep.subr.mxu0 0.0
    %1921 = vmatpush1.msra.mxu0 0.0
    %1922 = vmatprep.subr.mxu0 0.0
    %1923 = vmatpush1.msra.mxu0 0.0
    %1924 = vmatprep.subr.mxu0 0.0
    %1925 = vmatpush1.msra.mxu0 0.0
    %1926 = vmatprep.subr.mxu0 0.0
    %1927 = vmatpush1.msra.mxu0 0.0
    %1928 = vmatprep.subr.mxu0 0.0
    %1929 = vmatpush1.msra.mxu0 0.0
    %1930 = vmatprep.subr.mxu0 0.0
    %1931 = vmatpush1.msra.mxu0 0.0
    %1932 = vmatprep.subr.mxu0 0.0
    %1933 = vmatpush1.msra.mxu0 0.0
    %1934 = vmatprep.subr.mxu0 0.0
    %1935 = vmatpush1.msra.mxu0 0.0
    %1936 = vmatprep.subr.mxu0 0.0
    %1937 = vmatpush1.msra.mxu0 0.0
    %1938 = vmatprep.subr.mxu0 0.0
    %1939 = vmatpush1.msra.mxu0 0.0
    %1940 = vmatprep.subr.mxu0 0.0
    %1941 = vmatpush1.msra.mxu0 0.0
    %1942 = vmatprep.mubr.f32.mxu0 0.0
    %1943 = vmatmul.mubr.f32.gmra.mrb[0].mxu0 %v1876
    %v1944 = vpop.f32.mrb[0].mxu0
    %v1945 = vadd.f32 0.0, %v1944
    %v1946 = vpop.f32.mrb[0].mxu0
    %1947 = vdwg.mxu0
    %v1949 = vsel %vm349, %v1705, 0
    %1951 = vmatprep.subr.mxu0 0.0
    %1952 = vmatpush1.msra.mxu0 %v1706
    %1953 = vmatprep.subr.mxu0 0.0
    %1954 = vmatpush1.msra.mxu0 0.0
    %1955 = vmatprep.subr.mxu0 0.0
    %1956 = vmatpush1.msra.mxu0 0.0
    %1957 = vmatprep.subr.mxu0 0.0
    %1958 = vmatpush1.msra.mxu0 0.0
    %1959 = vmatprep.subr.mxu0 0.0
    %1960 = vmatpush1.msra.mxu0 0.0
    %1961 = vmatprep.subr.mxu0 0.0
    %1962 = vmatpush1.msra.mxu0 0.0
    %1963 = vmatprep.subr.mxu0 0.0
    %1964 = vmatpush1.msra.mxu0 0.0
    %1965 = vmatprep.subr.mxu0 0.0
    %1966 = vmatpush1.msra.mxu0 0.0
    %1967 = vmatprep.subr.mxu0 0.0
    %1968 = vmatpush1.msra.mxu0 0.0
    %1969 = vmatprep.subr.mxu0 0.0
    %1970 = vmatpush1.msra.mxu0 0.0
    %1971 = vmatprep.subr.mxu0 0.0
    %1972 = vmatpush1.msra.mxu0 0.0
    %1973 = vmatprep.subr.mxu0 0.0
    %1974 = vmatpush1.msra.mxu0 0.0
    %1975 = vmatprep.subr.mxu0 0.0
    %1976 = vmatpush1.msra.mxu0 0.0
    %1977 = vmatprep.subr.mxu0 0.0
    %1978 = vmatpush1.msra.mxu0 0.0
    %1979 = vmatprep.subr.mxu0 0.0
    %1980 = vmatpush1.msra.mxu0 0.0
    %1981 = vmatprep.subr.mxu0 0.0
    %1982 = vmatpush1.msra.mxu0 0.0
    %1983 = vmatprep.subr.mxu0 0.0
    %1984 = vmatpush1.msra.mxu0 0.0
    %1985 = vmatprep.subr.mxu0 0.0
    %1986 = vmatpush1.msra.mxu0 0.0
    %1987 = vmatprep.subr.mxu0 0.0
    %1988 = vmatpush1.msra.mxu0 0.0
    %1989 = vmatprep.subr.mxu0 0.0
    %1990 = vmatpush1.msra.mxu0 0.0
    %1991 = vmatprep.subr.mxu0 0.0
    %1992 = vmatpush1.msra.mxu0 0.0
    %1993 = vmatprep.subr.mxu0 0.0
    %1994 = vmatpush1.msra.mxu0 0.0
    %1995 = vmatprep.subr.mxu0 0.0
    %1996 = vmatpush1.msra.mxu0 0.0
    %1997 = vmatprep.subr.mxu0 0.0
    %1998 = vmatpush1.msra.mxu0 0.0
    %1999 = vmatprep.subr.mxu0 0.0
    %2000 = vmatpush1.msra.mxu0 0.0
    %2001 = vmatprep.subr.mxu0 0.0
    %2002 = vmatpush1.msra.mxu0 0.0
    %2003 = vmatprep.subr.mxu0 0.0
    %2004 = vmatpush1.msra.mxu0 0.0
    %2005 = vmatprep.subr.mxu0 0.0
    %2006 = vmatpush1.msra.mxu0 0.0
    %2007 = vmatprep.subr.mxu0 0.0
    %2008 = vmatpush1.msra.mxu0 0.0
    %2009 = vmatprep.subr.mxu0 0.0
    %2010 = vmatpush1.msra.mxu0 0.0
    %2011 = vmatprep.subr.mxu0 0.0
    %2012 = vmatpush1.msra.mxu0 0.0
    %2013 = vmatprep.subr.mxu0 0.0
    %2014 = vmatpush1.msra.mxu0 0.0
    %2015 = vmatprep.mubr.f32.mxu0 0.0
    %2016 = vmatmul.mubr.f32.gmra.mrb[0].mxu0 %v1949
    %v2017 = vpop.f32.mrb[0].mxu0
    %v2018 = vadd.f32 %v1945, %v2017
    %v2019 = vpop.f32.mrb[0].mxu0
    %2020 = vdwg.mxu0
    %2021 = vrot.lane.b32.xlu0 %v1391, 112
    %v2022 = vpop.permute.xlu0 %2021
    %2023 = vrot.lane.b32.xlu0 %v1464, 112
    %v2024 = vpop.permute.xlu0 %2023
    %v2025 = vsel %vm349, %v2022, 0
    %v2027 = vsel %vm349, %v2024, 0
    %2029 = vmatprep.subr.mxu0 0.0
    %2030 = vmatpush1.xpose.msra.mxu0 %v2027
    %2031 = vmatprep.subr.mxu0 0.0
    %2032 = vmatpush1.xpose.msra.mxu0 0.0
    %2033 = vmatprep.subr.mxu0 0.0
    %2034 = vmatpush1.xpose.msra.mxu0 0.0
    %2035 = vmatprep.subr.mxu0 0.0
    %2036 = vmatpush1.xpose.msra.mxu0 0.0
    %2037 = vmatprep.subr.mxu0 0.0
    %2038 = vmatpush1.xpose.msra.mxu0 0.0
    %2039 = vmatprep.subr.mxu0 0.0
    %2040 = vmatpush1.xpose.msra.mxu0 0.0
    %2041 = vmatprep.subr.mxu0 0.0
    %2042 = vmatpush1.xpose.msra.mxu0 0.0
    %2043 = vmatprep.subr.mxu0 0.0
    %2044 = vmatpush1.xpose.msra.mxu0 0.0
    %2045 = vmatprep.subr.mxu0 0.0
    %2046 = vmatpush1.xpose.msra.mxu0 0.0
    %2047 = vmatprep.subr.mxu0 0.0
    %2048 = vmatpush1.xpose.msra.mxu0 0.0
    %2049 = vmatprep.subr.mxu0 0.0
    %2050 = vmatpush1.xpose.msra.mxu0 0.0
    %2051 = vmatprep.subr.mxu0 0.0
    %2052 = vmatpush1.xpose.msra.mxu0 0.0
    %2053 = vmatprep.subr.mxu0 0.0
    %2054 = vmatpush1.xpose.msra.mxu0 0.0
    %2055 = vmatprep.subr.mxu0 0.0
    %2056 = vmatpush1.xpose.msra.mxu0 0.0
    %2057 = vmatprep.subr.mxu0 0.0
    %2058 = vmatpush1.xpose.msra.mxu0 0.0
    %2059 = vmatprep.subr.mxu0 0.0
    %2060 = vmatpush1.xpose.msra.mxu0 0.0
    %2061 = vmatprep.subr.mxu0 0.0
    %2062 = vmatpush1.xpose.msra.mxu0 0.0
    %2063 = vmatprep.subr.mxu0 0.0
    %2064 = vmatpush1.xpose.msra.mxu0 0.0
    %2065 = vmatprep.subr.mxu0 0.0
    %2066 = vmatpush1.xpose.msra.mxu0 0.0
    %2067 = vmatprep.subr.mxu0 0.0
    %2068 = vmatpush1.xpose.msra.mxu0 0.0
    %2069 = vmatprep.subr.mxu0 0.0
    %2070 = vmatpush1.xpose.msra.mxu0 0.0
    %2071 = vmatprep.subr.mxu0 0.0
    %2072 = vmatpush1.xpose.msra.mxu0 0.0
    %2073 = vmatprep.subr.mxu0 0.0
    %2074 = vmatpush1.xpose.msra.mxu0 0.0
    %2075 = vmatprep.subr.mxu0 0.0
    %2076 = vmatpush1.xpose.msra.mxu0 0.0
    %2077 = vmatprep.subr.mxu0 0.0
    %2078 = vmatpush1.xpose.msra.mxu0 0.0
    %2079 = vmatprep.subr.mxu0 0.0
    %2080 = vmatpush1.xpose.msra.mxu0 0.0
    %2081 = vmatprep.subr.mxu0 0.0
    %2082 = vmatpush1.xpose.msra.mxu0 0.0
    %2083 = vmatprep.subr.mxu0 0.0
    %2084 = vmatpush1.xpose.msra.mxu0 0.0
    %2085 = vmatprep.subr.mxu0 0.0
    %2086 = vmatpush1.xpose.msra.mxu0 0.0
    %2087 = vmatprep.subr.mxu0 0.0
    %2088 = vmatpush1.xpose.msra.mxu0 0.0
    %2089 = vmatprep.subr.mxu0 0.0
    %2090 = vmatpush1.xpose.msra.mxu0 0.0
    %2091 = vmatprep.subr.mxu0 0.0
    %2092 = vmatpush1.xpose.msra.mxu0 0.0
    %2093 = vmatprep.mubr.f32.mxu0 0.0
    %2094 = vmatmul.mubr.f32.gmra.mrb[0].mxu0 %v2025
    %v2095 = vpop.f32.mrb[0].mxu0
    %v2096 = vadd.f32 0.0, %v2095
    %v2097 = vpop.f32.mrb[0].mxu0
    %2098 = vdwg.mxu0
    %v2099 = vsel %vm1544, %v2096, -1000000.0
    %v2100 = vsel %vm349, %v2099, -inf
    %2101 = vmax.xlane.f32.xlu0 %v2100
    %v2102 = vpop.xlane.xlu0 %2101
    %v2103 = vsub.f32 %v2099, %v2102
    %v2104 = vmul.f32 %v2103, 1.442695
    %v2105 = vpow.pop %v2104
    %v2106 = vsel %vm349, %v2105, 0.0
    %2107 = vadd.xlane.f32.xlu0 %v2106
    %v2108 = vpop.xlane.xlu0 %2107
    %2109 = vrot.lane.b32.xlu0 %v1539, 112
    %v2110 = vpop.permute.xlu0 %2109
    %v2113 = vsel %vm349, %v2105, 0
    %2115 = vmatprep.subr.mxu0 0.0
    %2116 = vmatpush1.msra.mxu0 %v2110
    %2117 = vmatprep.subr.mxu0 0.0
    %2118 = vmatpush1.msra.mxu0 0.0
    %2119 = vmatprep.subr.mxu0 0.0
    %2120 = vmatpush1.msra.mxu0 0.0
    %2121 = vmatprep.subr.mxu0 0.0
    %2122 = vmatpush1.msra.mxu0 0.0
    %2123 = vmatprep.subr.mxu0 0.0
    %2124 = vmatpush1.msra.mxu0 0.0
    %2125 = vmatprep.subr.mxu0 0.0
    %2126 = vmatpush1.msra.mxu0 0.0
    %2127 = vmatprep.subr.mxu0 0.0
    %2128 = vmatpush1.msra.mxu0 0.0
    %2129 = vmatprep.subr.mxu0 0.0
    %2130 = vmatpush1.msra.mxu0 0.0
    %2131 = vmatprep.subr.mxu0 0.0
    %2132 = vmatpush1.msra.mxu0 0.0
    %2133 = vmatprep.subr.mxu0 0.0
    %2134 = vmatpush1.msra.mxu0 0.0
    %2135 = vmatprep.subr.mxu0 0.0
    %2136 = vmatpush1.msra.mxu0 0.0
    %2137 = vmatprep.subr.mxu0 0.0
    %2138 = vmatpush1.msra.mxu0 0.0
    %2139 = vmatprep.subr.mxu0 0.0
    %2140 = vmatpush1.msra.mxu0 0.0
    %2141 = vmatprep.subr.mxu0 0.0
    %2142 = vmatpush1.msra.mxu0 0.0
    %2143 = vmatprep.subr.mxu0 0.0
    %2144 = vmatpush1.msra.mxu0 0.0
    %2145 = vmatprep.subr.mxu0 0.0
    %2146 = vmatpush1.msra.mxu0 0.0
    %2147 = vmatprep.subr.mxu0 0.0
    %2148 = vmatpush1.msra.mxu0 0.0
    %2149 = vmatprep.subr.mxu0 0.0
    %2150 = vmatpush1.msra.mxu0 0.0
    %2151 = vmatprep.subr.mxu0 0.0
    %2152 = vmatpush1.msra.mxu0 0.0
    %2153 = vmatprep.subr.mxu0 0.0
    %2154 = vmatpush1.msra.mxu0 0.0
    %2155 = vmatprep.subr.mxu0 0.0
    %2156 = vmatpush1.msra.mxu0 0.0
    %2157 = vmatprep.subr.mxu0 0.0
    %2158 = vmatpush1.msra.mxu0 0.0
    %2159 = vmatprep.subr.mxu0 0.0
    %2160 = vmatpush1.msra.mxu0 0.0
    %2161 = vmatprep.subr.mxu0 0.0
    %2162 = vmatpush1.msra.mxu0 0.0
    %2163 = vmatprep.subr.mxu0 0.0
    %2164 = vmatpush1.msra.mxu0 0.0
    %2165 = vmatprep.subr.mxu0 0.0
    %2166 = vmatpush1.msra.mxu0 0.0
    %2167 = vmatprep.subr.mxu0 0.0
    %2168 = vmatpush1.msra.mxu0 0.0
    %2169 = vmatprep.subr.mxu0 0.0
    %2170 = vmatpush1.msra.mxu0 0.0
    %2171 = vmatprep.subr.mxu0 0.0
    %2172 = vmatpush1.msra.mxu0 0.0
    %2173 = vmatprep.subr.mxu0 0.0
    %2174 = vmatpush1.msra.mxu0 0.0
    %2175 = vmatprep.subr.mxu0 0.0
    %2176 = vmatpush1.msra.mxu0 0.0
    %2177 = vmatprep.subr.mxu0 0.0
    %2178 = vmatpush1.msra.mxu0 0.0
    %2179 = vmatprep.mubr.f32.mxu0 0.0
    %2180 = vmatmul.mubr.f32.gmra.mrb[0].mxu0 %v2113
    %v2181 = vpop.f32.mrb[0].mxu0
    %v2182 = vadd.f32 0.0, %v2181
    %v2183 = vpop.f32.mrb[0].mxu0
    %2184 = vdwg.mxu0
    %v2185 = vrcp.pop %v2108
    %v2186 = vmul.f32 %v2182, %v2185
    %v2187 = vld [vmem:[#allocation13 + $0x10] sm:$0xff]
    %v2189 = vsel %vm349, %v2186, 0
    %2191 = vmatprep.subr.mxu0 0.0
    %2192 = vmatpush1.msra.mxu0 %v2187
    %2193 = vmatprep.subr.mxu0 0.0
    %2194 = vmatpush1.msra.mxu0 0.0
    %2195 = vmatprep.subr.mxu0 0.0
    %2196 = vmatpush1.msra.mxu0 0.0
    %2197 = vmatprep.subr.mxu0 0.0
    %2198 = vmatpush1.msra.mxu0 0.0
    %2199 = vmatprep.subr.mxu0 0.0
    %2200 = vmatpush1.msra.mxu0 0.0
    %2201 = vmatprep.subr.mxu0 0.0
    %2202 = vmatpush1.msra.mxu0 0.0
    %2203 = vmatprep.subr.mxu0 0.0
    %2204 = vmatpush1.msra.mxu0 0.0
    %2205 = vmatprep.subr.mxu0 0.0
    %2206 = vmatpush1.msra.mxu0 0.0
    %2207 = vmatprep.subr.mxu0 0.0
    %2208 = vmatpush1.msra.mxu0 0.0
    %2209 = vmatprep.subr.mxu0 0.0
    %2210 = vmatpush1.msra.mxu0 0.0
    %2211 = vmatprep.subr.mxu0 0.0
    %2212 = vmatpush1.msra.mxu0 0.0
    %2213 = vmatprep.subr.mxu0 0.0
    %2214 = vmatpush1.msra.mxu0 0.0
    %2215 = vmatprep.subr.mxu0 0.0
    %2216 = vmatpush1.msra.mxu0 0.0
    %2217 = vmatprep.subr.mxu0 0.0
    %2218 = vmatpush1.msra.mxu0 0.0
    %2219 = vmatprep.subr.mxu0 0.0
    %2220 = vmatpush1.msra.mxu0 0.0
    %2221 = vmatprep.subr.mxu0 0.0
    %2222 = vmatpush1.msra.mxu0 0.0
    %2223 = vmatprep.subr.mxu0 0.0
    %2224 = vmatpush1.msra.mxu0 0.0
    %2225 = vmatprep.subr.mxu0 0.0
    %2226 = vmatpush1.msra.mxu0 0.0
    %2227 = vmatprep.subr.mxu0 0.0
    %2228 = vmatpush1.msra.mxu0 0.0
    %2229 = vmatprep.subr.mxu0 0.0
    %2230 = vmatpush1.msra.mxu0 0.0
    %2231 = vmatprep.subr.mxu0 0.0
    %2232 = vmatpush1.msra.mxu0 0.0
    %2233 = vmatprep.subr.mxu0 0.0
    %2234 = vmatpush1.msra.mxu0 0.0
    %2235 = vmatprep.subr.mxu0 0.0
    %2236 = vmatpush1.msra.mxu0 0.0
    %2237 = vmatprep.subr.mxu0 0.0
    %2238 = vmatpush1.msra.mxu0 0.0
    %2239 = vmatprep.subr.mxu0 0.0
    %2240 = vmatpush1.msra.mxu0 0.0
    %2241 = vmatprep.subr.mxu0 0.0
    %2242 = vmatpush1.msra.mxu0 0.0
    %2243 = vmatprep.subr.mxu0 0.0
    %2244 = vmatpush1.msra.mxu0 0.0
    %2245 = vmatprep.subr.mxu0 0.0
    %2246 = vmatpush1.msra.mxu0 0.0
    %2247 = vmatprep.subr.mxu0 0.0
    %2248 = vmatpush1.msra.mxu0 0.0
    %2249 = vmatprep.subr.mxu0 0.0
    %2250 = vmatpush1.msra.mxu0 0.0
    %2251 = vmatprep.subr.mxu0 0.0
    %2252 = vmatpush1.msra.mxu0 0.0
    %2253 = vmatprep.subr.mxu0 0.0
    %2254 = vmatpush1.msra.mxu0 0.0
    %2255 = vmatprep.mubr.f32.mxu0 0.0
    %2256 = vmatmul.mubr.f32.gmra.mrb[0].mxu0 %v2189
    %v2257 = vpop.f32.mrb[0].mxu0
    %v2258 = vadd.f32 0.0, %v2257
    %v2259 = vpop.f32.mrb[0].mxu0
    %2260 = vdwg.mxu0
    %v2261 = vadd.f32 %v2018, %v2258
    %2262 = vrot.lane.b32.xlu0 %v1391, 104
    %v2263 = vpop.permute.xlu0 %2262
    %2264 = vrot.lane.b32.xlu0 %v1464, 104
    %v2265 = vpop.permute.xlu0 %2264
    %v2266 = vsel %vm349, %v2263, 0
    %v2268 = vsel %vm349, %v2265, 0
    %2270 = vmatprep.subr.mxu0 0.0
    %2271 = vmatpush1.xpose.msra.mxu0 %v2268
    %2272 = vmatprep.subr.mxu0 0.0
    %2273 = vmatpush1.xpose.msra.mxu0 0.0
    %2274 = vmatprep.subr.mxu0 0.0
    %2275 = vmatpush1.xpose.msra.mxu0 0.0
    %2276 = vmatprep.subr.mxu0 0.0
    %2277 = vmatpush1.xpose.msra.mxu0 0.0
    %2278 = vmatprep.subr.mxu0 0.0
    %2279 = vmatpush1.xpose.msra.mxu0 0.0
    %2280 = vmatprep.subr.mxu0 0.0
    %2281 = vmatpush1.xpose.msra.mxu0 0.0
    %2282 = vmatprep.subr.mxu0 0.0
    %2283 = vmatpush1.xpose.msra.mxu0 0.0
    %2284 = vmatprep.subr.mxu0 0.0
    %2285 = vmatpush1.xpose.msra.mxu0 0.0
    %2286 = vmatprep.subr.mxu0 0.0
    %2287 = vmatpush1.xpose.msra.mxu0 0.0
    %2288 = vmatprep.subr.mxu0 0.0
    %2289 = vmatpush1.xpose.msra.mxu0 0.0
    %2290 = vmatprep.subr.mxu0 0.0
    %2291 = vmatpush1.xpose.msra.mxu0 0.0
    %2292 = vmatprep.subr.mxu0 0.0
    %2293 = vmatpush1.xpose.msra.mxu0 0.0
    %2294 = vmatprep.subr.mxu0 0.0
    %2295 = vmatpush1.xpose.msra.mxu0 0.0
    %2296 = vmatprep.subr.mxu0 0.0
    %2297 = vmatpush1.xpose.msra.mxu0 0.0
    %2298 = vmatprep.subr.mxu0 0.0
    %2299 = vmatpush1.xpose.msra.mxu0 0.0
    %2300 = vmatprep.subr.mxu0 0.0
    %2301 = vmatpush1.xpose.msra.mxu0 0.0
    %2302 = vmatprep.subr.mxu0 0.0
    %2303 = vmatpush1.xpose.msra.mxu0 0.0
    %2304 = vmatprep.subr.mxu0 0.0
    %2305 = vmatpush1.xpose.msra.mxu0 0.0
    %2306 = vmatprep.subr.mxu0 0.0
    %2307 = vmatpush1.xpose.msra.mxu0 0.0
    %2308 = vmatprep.subr.mxu0 0.0
    %2309 = vmatpush1.xpose.msra.mxu0 0.0
    %2310 = vmatprep.subr.mxu0 0.0
    %2311 = vmatpush1.xpose.msra.mxu0 0.0
    %2312 = vmatprep.subr.mxu0 0.0
    %2313 = vmatpush1.xpose.msra.mxu0 0.0
    %2314 = vmatprep.subr.mxu0 0.0
    %2315 = vmatpush1.xpose.msra.mxu0 0.0
    %2316 = vmatprep.subr.mxu0 0.0
    %2317 = vmatpush1.xpose.msra.mxu0 0.0
    %2318 = vmatprep.subr.mxu0 0.0
    %2319 = vmatpush1.xpose.msra.mxu0 0.0
    %2320 = vmatprep.subr.mxu0 0.0
    %2321 = vmatpush1.xpose.msra.mxu0 0.0
    %2322 = vmatprep.subr.mxu0 0.0
    %2323 = vmatpush1.xpose.msra.mxu0 0.0
    %2324 = vmatprep.subr.mxu0 0.0
    %2325 = vmatpush1.xpose.msra.mxu0 0.0
    %2326 = vmatprep.subr.mxu0 0.0
    %2327 = vmatpush1.xpose.msra.mxu0 0.0
    %2328 = vmatprep.subr.mxu0 0.0
    %2329 = vmatpush1.xpose.msra.mxu0 0.0
    %2330 = vmatprep.subr.mxu0 0.0
    %2331 = vmatpush1.xpose.msra.mxu0 0.0
    %2332 = vmatprep.subr.mxu0 0.0
    %2333 = vmatpush1.xpose.msra.mxu0 0.0
    %2334 = vmatprep.mubr.f32.mxu0 0.0
    %2335 = vmatmul.mubr.f32.gmra.mrb[0].mxu0 %v2266
    %v2336 = vpop.f32.mrb[0].mxu0
    %v2337 = vadd.f32 0.0, %v2336
    %v2338 = vpop.f32.mrb[0].mxu0
    %2339 = vdwg.mxu0
    %v2340 = vsel %vm1544, %v2337, -1000000.0
    %v2341 = vsel %vm349, %v2340, -inf
    %2342 = vmax.xlane.f32.xlu0 %v2341
    %v2343 = vpop.xlane.xlu0 %2342
    %v2344 = vsub.f32 %v2340, %v2343
    %v2345 = vmul.f32 %v2344, 1.442695
    %v2346 = vpow.pop %v2345
    %v2347 = vsel %vm349, %v2346, 0.0
    %2348 = vadd.xlane.f32.xlu0 %v2347
    %v2349 = vpop.xlane.xlu0 %2348
    %2350 = vrot.lane.b32.xlu0 %v1539, 104
    %v2351 = vpop.permute.xlu0 %2350
    %v2354 = vsel %vm349, %v2346, 0
    %2356 = vmatprep.subr.mxu0 0.0
    %2357 = vmatpush1.msra.mxu0 %v2351
    %2358 = vmatprep.subr.mxu0 0.0
    %2359 = vmatpush1.msra.mxu0 0.0
    %2360 = vmatprep.subr.mxu0 0.0
    %2361 = vmatpush1.msra.mxu0 0.0
    %2362 = vmatprep.subr.mxu0 0.0
    %2363 = vmatpush1.msra.mxu0 0.0
    %2364 = vmatprep.subr.mxu0 0.0
    %2365 = vmatpush1.msra.mxu0 0.0
    %2366 = vmatprep.subr.mxu0 0.0
    %2367 = vmatpush1.msra.mxu0 0.0
    %2368 = vmatprep.subr.mxu0 0.0
    %2369 = vmatpush1.msra.mxu0 0.0
    %2370 = vmatprep.subr.mxu0 0.0
    %2371 = vmatpush1.msra.mxu0 0.0
    %2372 = vmatprep.subr.mxu0 0.0
    %2373 = vmatpush1.msra.mxu0 0.0
    %2374 = vmatprep.subr.mxu0 0.0
    %2375 = vmatpush1.msra.mxu0 0.0
    %2376 = vmatprep.subr.mxu0 0.0
    %2377 = vmatpush1.msra.mxu0 0.0
    %2378 = vmatprep.subr.mxu0 0.0
    %2379 = vmatpush1.msra.mxu0 0.0
    %2380 = vmatprep.subr.mxu0 0.0
    %2381 = vmatpush1.msra.mxu0 0.0
    %2382 = vmatprep.subr.mxu0 0.0
    %2383 = vmatpush1.msra.mxu0 0.0
    %2384 = vmatprep.subr.mxu0 0.0
    %2385 = vmatpush1.msra.mxu0 0.0
    %2386 = vmatprep.subr.mxu0 0.0
    %2387 = vmatpush1.msra.mxu0 0.0
    %2388 = vmatprep.subr.mxu0 0.0
    %2389 = vmatpush1.msra.mxu0 0.0
    %2390 = vmatprep.subr.mxu0 0.0
    %2391 = vmatpush1.msra.mxu0 0.0
    %2392 = vmatprep.subr.mxu0 0.0
    %2393 = vmatpush1.msra.mxu0 0.0
    %2394 = vmatprep.subr.mxu0 0.0
    %2395 = vmatpush1.msra.mxu0 0.0
    %2396 = vmatprep.subr.mxu0 0.0
    %2397 = vmatpush1.msra.mxu0 0.0
    %2398 = vmatprep.subr.mxu0 0.0
    %2399 = vmatpush1.msra.mxu0 0.0
    %2400 = vmatprep.subr.mxu0 0.0
    %2401 = vmatpush1.msra.mxu0 0.0
    %2402 = vmatprep.subr.mxu0 0.0
    %2403 = vmatpush1.msra.mxu0 0.0
    %2404 = vmatprep.subr.mxu0 0.0
    %2405 = vmatpush1.msra.mxu0 0.0
    %2406 = vmatprep.subr.mxu0 0.0
    %2407 = vmatpush1.msra.mxu0 0.0
    %2408 = vmatprep.subr.mxu0 0.0
    %2409 = vmatpush1.msra.mxu0 0.0
    %2410 = vmatprep.subr.mxu0 0.0
    %2411 = vmatpush1.msra.mxu0 0.0
    %2412 = vmatprep.subr.mxu0 0.0
    %2413 = vmatpush1.msra.mxu0 0.0
    %2414 = vmatprep.subr.mxu0 0.0
    %2415 = vmatpush1.msra.mxu0 0.0
    %2416 = vmatprep.subr.mxu0 0.0
    %2417 = vmatpush1.msra.mxu0 0.0
    %2418 = vmatprep.subr.mxu0 0.0
    %2419 = vmatpush1.msra.mxu0 0.0
    %2420 = vmatprep.mubr.f32.mxu0 0.0
    %2421 = vmatmul.mubr.f32.gmra.mrb[0].mxu0 %v2354
    %v2422 = vpop.f32.mrb[0].mxu0
    %v2423 = vadd.f32 0.0, %v2422
    %v2424 = vpop.f32.mrb[0].mxu0
    %2425 = vdwg.mxu0
    %v2426 = vrcp.pop %v2349
    %v2427 = vmul.f32 %v2423, %v2426
    %v2428 = vld [vmem:[#allocation13 + $0x18] sm:$0xff]
    %v2430 = vsel %vm349, %v2427, 0
    %2432 = vmatprep.subr.mxu0 0.0
    %2433 = vmatpush1.msra.mxu0 %v2428
    %2434 = vmatprep.subr.mxu0 0.0
    %2435 = vmatpush1.msra.mxu0 0.0
    %2436 = vmatprep.subr.mxu0 0.0
    %2437 = vmatpush1.msra.mxu0 0.0
    %2438 = vmatprep.subr.mxu0 0.0
    %2439 = vmatpush1.msra.mxu0 0.0
    %2440 = vmatprep.subr.mxu0 0.0
    %2441 = vmatpush1.msra.mxu0 0.0
    %2442 = vmatprep.subr.mxu0 0.0
    %2443 = vmatpush1.msra.mxu0 0.0
    %2444 = vmatprep.subr.mxu0 0.0
    %2445 = vmatpush1.msra.mxu0 0.0
    %2446 = vmatprep.subr.mxu0 0.0
    %2447 = vmatpush1.msra.mxu0 0.0
    %2448 = vmatprep.subr.mxu0 0.0
    %2449 = vmatpush1.msra.mxu0 0.0
    %2450 = vmatprep.subr.mxu0 0.0
    %2451 = vmatpush1.msra.mxu0 0.0
    %2452 = vmatprep.subr.mxu0 0.0
    %2453 = vmatpush1.msra.mxu0 0.0
    %2454 = vmatprep.subr.mxu0 0.0
    %2455 = vmatpush1.msra.mxu0 0.0
    %2456 = vmatprep.subr.mxu0 0.0
    %2457 = vmatpush1.msra.mxu0 0.0
    %2458 = vmatprep.subr.mxu0 0.0
    %2459 = vmatpush1.msra.mxu0 0.0
    %2460 = vmatprep.subr.mxu0 0.0
    %2461 = vmatpush1.msra.mxu0 0.0
    %2462 = vmatprep.subr.mxu0 0.0
    %2463 = vmatpush1.msra.mxu0 0.0
    %2464 = vmatprep.subr.mxu0 0.0
    %2465 = vmatpush1.msra.mxu0 0.0
    %2466 = vmatprep.subr.mxu0 0.0
    %2467 = vmatpush1.msra.mxu0 0.0
    %2468 = vmatprep.subr.mxu0 0.0
    %2469 = vmatpush1.msra.mxu0 0.0
    %2470 = vmatprep.subr.mxu0 0.0
    %2471 = vmatpush1.msra.mxu0 0.0
    %2472 = vmatprep.subr.mxu0 0.0
    %2473 = vmatpush1.msra.mxu0 0.0
    %2474 = vmatprep.subr.mxu0 0.0
    %2475 = vmatpush1.msra.mxu0 0.0
    %2476 = vmatprep.subr.mxu0 0.0
    %2477 = vmatpush1.msra.mxu0 0.0
    %2478 = vmatprep.subr.mxu0 0.0
    %2479 = vmatpush1.msra.mxu0 0.0
    %2480 = vmatprep.subr.mxu0 0.0
    %2481 = vmatpush1.msra.mxu0 0.0
    %2482 = vmatprep.subr.mxu0 0.0
    %2483 = vmatpush1.msra.mxu0 0.0
    %2484 = vmatprep.subr.mxu0 0.0
    %2485 = vmatpush1.msra.mxu0 0.0
    %2486 = vmatprep.subr.mxu0 0.0
    %2487 = vmatpush1.msra.mxu0 0.0
    %2488 = vmatprep.subr.mxu0 0.0
    %2489 = vmatpush1.msra.mxu0 0.0
    %2490 = vmatprep.subr.mxu0 0.0
    %2491 = vmatpush1.msra.mxu0 0.0
    %2492 = vmatprep.subr.mxu0 0.0
    %2493 = vmatpush1.msra.mxu0 0.0
    %2494 = vmatprep.subr.mxu0 0.0
    %2495 = vmatpush1.msra.mxu0 0.0
    %2496 = vmatprep.mubr.f32.mxu0 0.0
    %2497 = vmatmul.mubr.f32.gmra.mrb[0].mxu0 %v2430
    %v2498 = vpop.f32.mrb[0].mxu0
    %v2499 = vadd.f32 0.0, %v2498
    %v2500 = vpop.f32.mrb[0].mxu0
    %2501 = vdwg.mxu0
    %v2502 = vadd.f32 %v2261, %v2499
    %s2503 = scalar_lea.vmem [#allocation15], 8
    %2504 = vst.msk [vmem:[%s2503] sm:$0xff] %vm1308, %v2502
    // Predicated region
    $region54: #{tpu_custom_call.1} parent=1 // pred_check
      _
    $region55: #{tpu_custom_call.1} parent=1 // pred_check_branch
      %2506 = sbr.rel (0) target = $region57
    $region56: #{tpu_custom_call.1} parent=1 // pred_region
      %s2508 = ssub.s32 256, 256
      %2509 = vsyncadd [#allocation6], %s2508
      %s2510 = sshll.u32 [#allocation15], 4
      %s2511 = int_to_ptr.vmem [resolvable:$true] %s2510
      %2516 = dma.vmem_to_hbm [thread:$0]  %s2511, 256, %s8, [#allocation6], 128, 128, 8
    $region57: #{tpu_custom_call.1} parent=1 // pred_fallthru
      _
    // Predicated region
    $region58: #{tpu_custom_call.1} parent=1 // pred_check
      _
    $region59: #{tpu_custom_call.1} parent=1 // pred_check_branch
      %2518 = sbr.rel (0) target = $region61
    $region60: #{tpu_custom_call.1} parent=1 // pred_region
      %2519 = dma.done [#allocation6], 256
    $region61: #{tpu_custom_call.1} parent=1 // pred_fallthru
      _
    %2520 = vsyncpa [#allocation5], 1
    %2521 = vsyncpa [#allocation8], 1
    %2522 = vsyncpa [#allocation11], 1
    %2523 = vsyncpa [#allocation14], 1
    %2524 = vsyncpa [#allocation6], 1

</llo_original>
